<compile_context>
chip_gen: v7x
topology: tpu7x:2x2x1
jax: 0.10.0
libtpu: 0.0.40
codegen_flags: <defaults>
</compile_context>

<pallas_src>
import jax
import jax.numpy as jnp
from jax.experimental import pallas as pl
from jax.experimental.pallas import tpu as pltpu


# ------------------------------ helpers --------------------------------------

def _round_up(x, m):
    return ((x + m - 1) // m) * m


def _pad_to(a, shape):
    """Zero-pad `a` up to `shape` (each target dim >= source dim)."""
    pads = [(0, t - s) for s, t in zip(a.shape, shape)]
    return jnp.pad(a, pads)


# ------------------------------ GCN layer 1 kernel ----------------------------

def _gcn_layer_kernel(a_ref, x_ref, w_ref, b_ref, out_ref, acc_ref):
    """out_tile = relu((sum_k A[i,k] @ X[k]) @ W + b).

    The K reduction accumulates (A @ X) into an f32 VMEM scratch; the weight
    multiply + bias + ReLU are fused into the last-K epilogue.
    """
    k = pl.program_id(1)

    @pl.when(k == 0)
    def _init():
        acc_ref[...] = jnp.zeros_like(acc_ref)

    acc_ref[...] += jnp.dot(a_ref[...], x_ref[...],
                            preferred_element_type=jnp.float32)

    @pl.when(k == pl.num_programs(1) - 1)
    def _finalize():
        h = jnp.dot(acc_ref[...].astype(w_ref.dtype), w_ref[...],
                    preferred_element_type=jnp.float32) + b_ref[...]
        out_ref[...] = jnp.maximum(h, 0.0).astype(out_ref.dtype)


def _gcn_layer(a, x, w, b, *, tile, vmem_limit_bytes):
    n = a.shape[0]
    f = x.shape[1]
    h = w.shape[1]
    grid = (n // tile, n // tile)
    return pl.pallas_call(
        _gcn_layer_kernel,
        out_shape=jax.ShapeDtypeStruct((n, h), jnp.bfloat16),
        grid_spec=pltpu.PrefetchScalarGridSpec(
            num_scalar_prefetch=0,
            grid=grid,
            in_specs=[
                pl.BlockSpec((tile, tile), lambda i, k: (i, k)),  # A_hat tile
                pl.BlockSpec((tile, f),    lambda i, k: (k, 0)),  # X K-slab
                pl.BlockSpec((f, h),       lambda i, k: (0, 0)),  # W (resident)
                pl.BlockSpec((1, h),       lambda i, k: (0, 0)),  # bias
            ],
            out_specs=pl.BlockSpec((tile, h), lambda i, k: (i, 0)),
            scratch_shapes=[pltpu.VMEM((tile, f), jnp.float32)],
        ),
        compiler_params=pltpu.CompilerParams(
            dimension_semantics=("parallel", "arbitrary"),
            vmem_limit_bytes=vmem_limit_bytes,
        ),
    )(a, x, w, b)


# ------------- GCN layer 2 fused with global_mean_pool + classifier -----------

def _gcn2_pool_classify_kernel(a_ref, h1_ref, w2_ref, b2_ref, pool_ref,
                               wc_ref, bc_ref, logits_ref, pooled_ref,
                               acc_ref, pooled_acc_ref):
    """Per row tile i: h2_i = relu((sum_k A[i,k] @ h1[k]) @ W2 + b2);
    pooled += Pool[:, i] @ h2_i.  At the last grid point: logits = pooled@Wc+bc.
    """
    i = pl.program_id(0)
    k = pl.program_id(1)
    last_i = pl.num_programs(0) - 1
    last_k = pl.num_programs(1) - 1

    @pl.when(jnp.logical_and(i == 0, k == 0))
    def _init_pooled():
        pooled_acc_ref[...] = jnp.zeros_like(pooled_acc_ref)

    @pl.when(k == 0)
    def _init_row():
        acc_ref[...] = jnp.zeros_like(acc_ref)

    acc_ref[...] += jnp.dot(a_ref[...], h1_ref[...],
                            preferred_element_type=jnp.float32)

    @pl.when(k == last_k)
    def _row_epilogue():
        h2 = jnp.dot(acc_ref[...].astype(w2_ref.dtype), w2_ref[...],
                     preferred_element_type=jnp.float32) + b2_ref[...]
        h2 = jnp.maximum(h2, 0.0)
        pooled_acc_ref[...] += jnp.dot(pool_ref[...], h2.astype(pool_ref.dtype),
                                       preferred_element_type=jnp.float32)

    @pl.when(jnp.logical_and(i == last_i, k == last_k))
    def _finalize():
        pooled = pooled_acc_ref[...]
        logits = jnp.dot(pooled.astype(wc_ref.dtype), wc_ref[...],
                         preferred_element_type=jnp.float32) + bc_ref[...]
        pooled_ref[...] = pooled.astype(pooled_ref.dtype)
        logits_ref[...] = logits.astype(logits_ref.dtype)


def _gcn2_pool_classify(a, h1, w2, b2, pool, wc, bc, *, tile, vmem_limit_bytes):
    n = a.shape[0]
    h = w2.shape[1]
    g = pool.shape[0]
    c = wc.shape[1]
    grid = (n // tile, n // tile)
    return pl.pallas_call(
        _gcn2_pool_classify_kernel,
        out_shape=(jax.ShapeDtypeStruct((g, c), jnp.float32),
                   jax.ShapeDtypeStruct((g, h), jnp.float32)),
        grid_spec=pltpu.PrefetchScalarGridSpec(
            num_scalar_prefetch=0,
            grid=grid,
            in_specs=[
                pl.BlockSpec((tile, tile), lambda i, k: (i, k)),   # A_hat tile
                pl.BlockSpec((tile, h),    lambda i, k: (k, 0)),   # h1 K-slab
                pl.BlockSpec((h, h),       lambda i, k: (0, 0)),   # W2 (resident)
                pl.BlockSpec((1, h),       lambda i, k: (0, 0)),   # b2
                pl.BlockSpec((g, tile),    lambda i, k: (0, i)),   # pool row-slab
                pl.BlockSpec((h, c),       lambda i, k: (0, 0)),   # Wc (resident)
                pl.BlockSpec((1, c),       lambda i, k: (0, 0)),   # bc
            ],
            out_specs=(pl.BlockSpec((g, c), lambda i, k: (0, 0)),
                       pl.BlockSpec((g, h), lambda i, k: (0, 0))),
            scratch_shapes=[pltpu.VMEM((tile, h), jnp.float32),   # A@h1 acc
                            pltpu.VMEM((g, h), jnp.float32)],     # pooled acc
        ),
        compiler_params=pltpu.CompilerParams(
            # Row axis carries the pooled accumulator -> must stay sequential.
            dimension_semantics=("arbitrary", "arbitrary"),
            vmem_limit_bytes=vmem_limit_bytes,
        ),
    )(a, h1, w2, b2, pool, wc, bc)


# ------------------------------ forward wrapper --------------------------------

def gnn_forward(x, a_hat, w1, b1, w2, b2, pool, wc, bc, *,
                tile=128, vmem_limit_bytes=48 * 1024 * 1024):
    n, f = x.shape
    h = w1.shape[1]
    g = pool.shape[0]
    c = wc.shape[1]

    n_pad = _round_up(n, tile)     # node dim -> multiple of the A tile
    h_pad = _round_up(h, 128)      # lane-dense hidden dim
    c_pad = _round_up(c, 128)      # lane-dense classifier output
    g_pad = _round_up(g, 8)        # sublane-aligned graph dim

    # Zero padding is semantically neutral: padded nodes have zero adjacency
    # and zero pooling weight; padded hidden units have zero weights and bias
    # (ReLU(0)=0, zero fan-out), padded classes are sliced off.
    a_p    = _pad_to(a_hat, (n_pad, n_pad)).astype(jnp.bfloat16)
    x_p    = _pad_to(x,     (n_pad, f)).astype(jnp.bfloat16)
    w1_p   = _pad_to(w1,    (f, h_pad)).astype(jnp.bfloat16)
    b1_p   = _pad_to(b1,    (1, h_pad)).astype(jnp.float32)
    w2_p   = _pad_to(w2,    (h_pad, h_pad)).astype(jnp.bfloat16)
    b2_p   = _pad_to(b2,    (1, h_pad)).astype(jnp.float32)
    pool_p = _pad_to(pool,  (g_pad, n_pad)).astype(jnp.bfloat16)
    wc_p   = _pad_to(wc,    (h_pad, c_pad)).astype(jnp.bfloat16)
    bc_p   = _pad_to(bc,    (1, c_pad)).astype(jnp.float32)

    # GCNConv1 + ReLU.
    h1 = _gcn_layer(a_p, x_p, w1_p, b1_p, tile=tile,
                    vmem_limit_bytes=vmem_limit_bytes)
    # TODO(synk): nn.Dropout(0.5) is a train-time op; eval-mode identity here.

    # GCNConv2 + ReLU fused with global_mean_pool + classifier
    # (h2 never touches HBM).
    logits_p, pooled_p = _gcn2_pool_classify(
        a_p, h1, w2_p, b2_p, pool_p, wc_p, bc_p,
        tile=tile, vmem_limit_bytes=vmem_limit_bytes)

    return logits_p[:g, :c], pooled_p[:g, :h]


# ----------------------------- plain-JAX glue ---------------------------------
# Graph-structure-only operands: built ONCE outside the hot path.

def build_normalized_adjacency(edge_index, num_nodes):
    """A_hat = D^-1/2 (A + I) D^-1/2.

    Treats the graph as simple (duplicate edges clipped to weight 1) and
    replaces any pre-existing self-loops with the canonical unit self-loop
    (matching add_remaining_self_loops).
    # TODO(synk): PyG's gcn_norm on a directed edge_index uses the dst-degree
    # of A+I on both sides; this matches only for symmetric graphs (used here).
    """
    src, dst = edge_index[0], edge_index[1]
    a = jnp.zeros((num_nodes, num_nodes), jnp.float32)
    a = a.at[dst, src].add(1.0)                              # dst <- src
    a = jnp.minimum(a, 1.0)                                  # simple graph
    a = a * (1.0 - jnp.eye(num_nodes, dtype=jnp.float32))    # drop old self-loops
    a = a + jnp.eye(num_nodes, dtype=jnp.float32)            # unit self-loops
    deg = jnp.sum(a, axis=1)
    d_inv_sqrt = jnp.where(deg > 0, 1.0 / jnp.sqrt(deg), 0.0)
    return d_inv_sqrt[:, None] * a * d_inv_sqrt[None, :]


def build_mean_pool_matrix(batch, num_graphs):
    """(G, N) matrix with 1/count_g on nodes belonging to graph g."""
    onehot = (batch[None, :] == jnp.arange(num_graphs)[:, None]).astype(jnp.float32)
    counts = jnp.maximum(jnp.sum(onehot, axis=1, keepdims=True), 1.0)
    return onehot / counts


# ------------------------------------ demo ------------------------------------

if __name__ == "__main__":
    # G = 8 graphs of 32 nodes each batched into ONE block-diagonal A_hat
    # (N = 256 -> 2x2 grid of 128-tiles), F = 16 features,
    # hidden_dim = 128 (lane-dense), num_classes = 4.
    num_graphs = 8
    nodes_per_graph = 32
    num_nodes = num_graphs * nodes_per_graph
    num_features = 16
    hidden_dim = 128
    num_classes = 4
    edges_per_graph = 64

    key = jax.random.PRNGKey(0)
    kx, ke, kw1, kb1, kw2, kb2, kwc, kbc = jax.random.split(key, 8)

    x = jax.random.normal(kx, (num_nodes, num_features), jnp.float32)

    # Random intra-graph edges, symmetrized (undirected).
    ks, kd = jax.random.split(ke)
    offs = jnp.repeat(jnp.arange(num_graphs, dtype=jnp.int32) * nodes_per_graph,
                      edges_per_graph)
    src = jax.random.randint(ks, (num_graphs * edges_per_graph,), 0,
                             nodes_per_graph, dtype=jnp.int32) + offs
    dst = jax.random.randint(kd, (num_graphs * edges_per_graph,), 0,
                             nodes_per_graph, dtype=jnp.int32) + offs
    edge_index = jnp.stack([jnp.concatenate([src, dst]),
                            jnp.concatenate([dst, src])])
    batch = jnp.repeat(jnp.arange(num_graphs, dtype=jnp.int32), nodes_per_graph)

    # Parameters (shapes from the module's __init__).
    scale = 0.1
    w1 = scale * jax.random.normal(kw1, (num_features, hidden_dim), jnp.float32)
    b1 = scale * jax.random.normal(kb1, (1, hidden_dim), jnp.float32)
    w2 = scale * jax.random.normal(kw2, (hidden_dim, hidden_dim), jnp.float32)
    b2 = scale * jax.random.normal(kb2, (1, hidden_dim), jnp.float32)
    wc = scale * jax.random.normal(kwc, (hidden_dim, num_classes), jnp.float32)
    bc = scale * jax.random.normal(kbc, (1, num_classes), jnp.float32)

    # Structure-dependent operands, precomputed outside the hot path.
    a_hat = build_normalized_adjacency(edge_index, num_nodes)
    pool = build_mean_pool_matrix(batch, num_graphs)

    fwd = jax.jit(gnn_forward)
    logits, pooled = fwd(x, a_hat, w1, b1, w2, b2, pool, wc, bc)
    jax.block_until_ready((logits, pooled))

    # Pure-JAX f32 reference (eval-mode module semantics).
    def reference(x, a, w1, b1, w2, b2, pool, wc, bc):
        h1 = jnp.maximum(a @ (x @ w1) + b1, 0.0)
        h2 = jnp.maximum(a @ (h1 @ w2) + b2, 0.0)
        p = pool @ h2
        return p @ wc + bc, p

    ref_logits, ref_pooled = reference(x, a_hat, w1, b1, w2, b2, pool, wc, bc)

    assert logits.shape == (num_graphs, num_classes)
    assert pooled.shape == (num_graphs, hidden_dim)
    assert jnp.allclose(logits, ref_logits, atol=5e-2, rtol=5e-2)
    assert jnp.allclose(pooled, ref_pooled, atol=5e-2, rtol=5e-2)
    print("KERNEL_OK")
</pallas_src>

<mosaic_0001>
module attributes {stable_mosaic.version = 11 : i64} {
  func.func @_gcn_layer_kernel(%arg0: i32, %arg1: i32, %arg2: memref<128x128xbf16, #tpu.memory_space<vmem>>, %arg3: memref<128x16xbf16, #tpu.memory_space<vmem>>, %arg4: memref<16x128xbf16, #tpu.memory_space<vmem>>, %arg5: memref<1x128xf32, #tpu.memory_space<vmem>>, %arg6: memref<128x128xbf16, #tpu.memory_space<vmem>>, %arg7: memref<128x16xf32, #tpu.memory_space<vmem>>) attributes {dimension_semantics = [#tpu.dimension_semantics<parallel>, #tpu.dimension_semantics<arbitrary>], iteration_bounds = array<i64: 2, 2>, scalar_prefetch = 0 : i64, scratch_operands = 1 : i64, tpu.core_type = #tpu.core_type<tc>, window_params = [{transform_indices = @transform_0, window_bounds = array<i64: 128, 128>}, {transform_indices = @transform_1, window_bounds = array<i64: 128, 16>}, {pipeline_mode = #tpu.pipeline_mode<synchronous>, transform_indices = @transform_2, window_bounds = array<i64: 16, 128>}, {pipeline_mode = #tpu.pipeline_mode<synchronous>, transform_indices = @transform_3, window_bounds = array<i64: 1, 128>}, {transform_indices = @transform_4, window_bounds = array<i64: 128, 128>}]} {
    %c0_i32 = arith.constant 0 : i32
    %0 = arith.cmpi eq, %arg1, %c0_i32 : i32
    %1 = arith.extui %0 : i1 to i32
    %c0_i32_0 = arith.constant 0 : i32
    %2 = arith.cmpi ne, %1, %c0_i32_0 : i32
    scf.if %2 {
      %cst_9 = arith.constant 0.000000e+00 : f32
      %12 = vector.broadcast %cst_9 : f32 to vector<128x16xf32>
      %c0_10 = arith.constant 0 : index
      %c0_11 = arith.constant 0 : index
      %13 = vector.load %arg7[%c0_10, %c0_11] : memref<128x16xf32, #tpu.memory_space<vmem>>, vector<128x16xf32>
      tpu.vector_store %arg7[%c0_10, %c0_11], %12 {strides = array<i32>} : memref<128x16xf32, #tpu.memory_space<vmem>>, vector<128x16xf32>,
    } else {
    }
    %c0 = arith.constant 0 : index
    %c0_1 = arith.constant 0 : index
    %3 = vector.load %arg7[%c0, %c0_1] : memref<128x16xf32, #tpu.memory_space<vmem>>, vector<128x16xf32>
    %c0_2 = arith.constant 0 : index
    %c0_3 = arith.constant 0 : index
    %4 = vector.load %arg2[%c0_2, %c0_3] : memref<128x128xbf16, #tpu.memory_space<vmem>>, vector<128x128xbf16>
    %c0_4 = arith.constant 0 : index
    %c0_5 = arith.constant 0 : index
    %5 = vector.load %arg3[%c0_4, %c0_5] : memref<128x16xbf16, #tpu.memory_space<vmem>>, vector<128x16xbf16>
    %cst = arith.constant dense<0.000000e+00> : vector<128x16xf32>
    %6 = tpu.matmul %4, %5, %cst {dimension_numbers = #tpu.dot_dimension_numbers<[1], [0], [0], [1], [0, 0, 1, 1], [], []>} : vector<128x128xbf16>, vector<128x16xbf16>, vector<128x16xf32> -> vector<128x16xf32>
    %7 = arith.addf %3, %6 : vector<128x16xf32>
    %c0_6 = arith.constant 0 : index
    %c0_7 = arith.constant 0 : index
    %8 = vector.load %arg7[%c0_6, %c0_7] : memref<128x16xf32, #tpu.memory_space<vmem>>, vector<128x16xf32>
    tpu.vector_store %arg7[%c0_6, %c0_7], %7 {strides = array<i32>} : memref<128x16xf32, #tpu.memory_space<vmem>>, vector<128x16xf32>,
    %c1_i32 = arith.constant 1 : i32
    %9 = arith.cmpi eq, %arg1, %c1_i32 : i32
    %10 = arith.extui %9 : i1 to i32
    %c0_i32_8 = arith.constant 0 : i32
    %11 = arith.cmpi ne, %10, %c0_i32_8 : i32
    scf.if %11 {
      %c0_9 = arith.constant 0 : index
      %c0_10 = arith.constant 0 : index
      %12 = vector.load %arg7[%c0_9, %c0_10] : memref<128x16xf32, #tpu.memory_space<vmem>>, vector<128x16xf32>
      %13 = arith.truncf %12 : vector<128x16xf32> to vector<128x16xbf16>
      %c0_11 = arith.constant 0 : index
      %c0_12 = arith.constant 0 : index
      %14 = vector.load %arg4[%c0_11, %c0_12] : memref<16x128xbf16, #tpu.memory_space<vmem>>, vector<16x128xbf16>
      %cst_13 = arith.constant dense<0.000000e+00> : vector<128x128xf32>
      %15 = tpu.matmul %13, %14, %cst_13 {dimension_numbers = #tpu.dot_dimension_numbers<[1], [0], [0], [1], [0, 0, 1, 1], [], []>} : vector<128x16xbf16>, vector<16x128xbf16>, vector<128x128xf32> -> vector<128x128xf32>
      %c0_14 = arith.constant 0 : index
      %c0_15 = arith.constant 0 : index
      %16 = vector.load %arg5[%c0_14, %c0_15] : memref<1x128xf32, #tpu.memory_space<vmem>>, vector<1x128xf32>
      %17 = vector.broadcast %16 : vector<1x128xf32> to vector<128x128xf32>
      %18 = arith.addf %15, %17 : vector<128x128xf32>
      %cst_16 = arith.constant 0.000000e+00 : f32
      %19 = vector.broadcast %cst_16 : f32 to vector<128x128xf32>
      %20 = arith.maximumf %18, %19 : vector<128x128xf32>
      %21 = arith.truncf %20 : vector<128x128xf32> to vector<128x128xbf16>
      %c0_17 = arith.constant 0 : index
      %c0_18 = arith.constant 0 : index
      %22 = vector.load %arg6[%c0_17, %c0_18] : memref<128x128xbf16, #tpu.memory_space<vmem>>, vector<128x128xbf16>
      tpu.vector_store %arg6[%c0_17, %c0_18], %21 {strides = array<i32>} : memref<128x128xbf16, #tpu.memory_space<vmem>>, vector<128x128xbf16>,
    } else {
    }
    return
  }
  func.func @transform_0(%arg0: i32, %arg1: i32) -> (i32, i32) {
    %c0_i32 = arith.constant 0 : i32
    return %arg0, %arg1 : i32, i32
  }
  func.func @transform_1(%arg0: i32, %arg1: i32) -> (i32, i32) {
    %c0_i32 = arith.constant 0 : i32
    %c0_i32_0 = arith.constant 0 : i32
    return %arg1, %c0_i32 : i32, i32
  }
  func.func @transform_2(%arg0: i32, %arg1: i32) -> (i32, i32) {
    %c0_i32 = arith.constant 0 : i32
    %c0_i32_0 = arith.constant 0 : i32
    %c0_i32_1 = arith.constant 0 : i32
    return %c0_i32, %c0_i32_0 : i32, i32
  }
  func.func @transform_3(%arg0: i32, %arg1: i32) -> (i32, i32) {
    %c0_i32 = arith.constant 0 : i32
    %c0_i32_0 = arith.constant 0 : i32
    %c0_i32_1 = arith.constant 0 : i32
    return %c0_i32, %c0_i32_0 : i32, i32
  }
  func.func @transform_4(%arg0: i32, %arg1: i32) -> (i32, i32) {
    %c0_i32 = arith.constant 0 : i32
    %c0_i32_0 = arith.constant 0 : i32
    return %arg0, %c0_i32 : i32, i32
  }
}

module attributes {stable_mosaic.version = 11 : i64} {
  func.func @_gcn2_pool_classify_kernel(%arg0: i32, %arg1: i32, %arg2: memref<128x128xbf16, #tpu.memory_space<vmem>>, %arg3: memref<128x128xbf16, #tpu.memory_space<vmem>>, %arg4: memref<128x128xbf16, #tpu.memory_space<vmem>>, %arg5: memref<1x128xf32, #tpu.memory_space<vmem>>, %arg6: memref<8x128xbf16, #tpu.memory_space<vmem>>, %arg7: memref<128x128xbf16, #tpu.memory_space<vmem>>, %arg8: memref<1x128xf32, #tpu.memory_space<vmem>>, %arg9: memref<8x128xf32, #tpu.memory_space<vmem>>, %arg10: memref<8x128xf32, #tpu.memory_space<vmem>>, %arg11: memref<128x128xf32, #tpu.memory_space<vmem>>, %arg12: memref<8x128xf32, #tpu.memory_space<vmem>>) attributes {dimension_semantics = [#tpu.dimension_semantics<arbitrary>, #tpu.dimension_semantics<arbitrary>], iteration_bounds = array<i64: 2, 2>, scalar_prefetch = 0 : i64, scratch_operands = 2 : i64, tpu.core_type = #tpu.core_type<tc>, window_params = [{transform_indices = @transform_0, window_bounds = array<i64: 128, 128>}, {transform_indices = @transform_1, window_bounds = array<i64: 128, 128>}, {pipeline_mode = #tpu.pipeline_mode<synchronous>, transform_indices = @transform_2, window_bounds = array<i64: 128, 128>}, {pipeline_mode = #tpu.pipeline_mode<synchronous>, transform_indices = @transform_3, window_bounds = array<i64: 1, 128>}, {transform_indices = @transform_4, window_bounds = array<i64: 8, 128>}, {pipeline_mode = #tpu.pipeline_mode<synchronous>, transform_indices = @transform_5, window_bounds = array<i64: 128, 128>}, {pipeline_mode = #tpu.pipeline_mode<synchronous>, transform_indices = @transform_6, window_bounds = array<i64: 1, 128>}, {pipeline_mode = #tpu.pipeline_mode<synchronous>, transform_indices = @transform_7, window_bounds = array<i64: 8, 128>}, {pipeline_mode = #tpu.pipeline_mode<synchronous>, transform_indices = @transform_8, window_bounds = array<i64: 8, 128>}]} {
    %c0_i32 = arith.constant 0 : i32
    %0 = arith.cmpi eq, %arg0, %c0_i32 : i32
    %c0_i32_0 = arith.constant 0 : i32
    %1 = arith.cmpi eq, %arg1, %c0_i32_0 : i32
    %2 = arith.andi %0, %1 : i1
    %3 = arith.extui %2 : i1 to i32
    %c0_i32_1 = arith.constant 0 : i32
    %4 = arith.cmpi ne, %3, %c0_i32_1 : i32
    scf.if %4 {
      %cst_15 = arith.constant 0.000000e+00 : f32
      %22 = vector.broadcast %cst_15 : f32 to vector<8x128xf32>
      %c0_16 = arith.constant 0 : index
      %c0_17 = arith.constant 0 : index
      %23 = vector.load %arg12[%c0_16, %c0_17] : memref<8x128xf32, #tpu.memory_space<vmem>>, vector<8x128xf32>
      tpu.vector_store %arg12[%c0_16, %c0_17], %22 {strides = array<i32>} : memref<8x128xf32, #tpu.memory_space<vmem>>, vector<8x128xf32>,
    } else {
    }
    %c0_i32_2 = arith.constant 0 : i32
    %5 = arith.cmpi eq, %arg1, %c0_i32_2 : i32
    %6 = arith.extui %5 : i1 to i32
    %c0_i32_3 = arith.constant 0 : i32
    %7 = arith.cmpi ne, %6, %c0_i32_3 : i32
    scf.if %7 {
      %cst_15 = arith.constant 0.000000e+00 : f32
      %22 = vector.broadcast %cst_15 : f32 to vector<128x128xf32>
      %c0_16 = arith.constant 0 : index
      %c0_17 = arith.constant 0 : index
      %23 = vector.load %arg11[%c0_16, %c0_17] : memref<128x128xf32, #tpu.memory_space<vmem>>, vector<128x128xf32>
      tpu.vector_store %arg11[%c0_16, %c0_17], %22 {strides = array<i32>} : memref<128x128xf32, #tpu.memory_space<vmem>>, vector<128x128xf32>,
    } else {
    }
    %c0 = arith.constant 0 : index
    %c0_4 = arith.constant 0 : index
    %8 = vector.load %arg11[%c0, %c0_4] : memref<128x128xf32, #tpu.memory_space<vmem>>, vector<128x128xf32>
    %c0_5 = arith.constant 0 : index
    %c0_6 = arith.constant 0 : index
    %9 = vector.load %arg2[%c0_5, %c0_6] : memref<128x128xbf16, #tpu.memory_space<vmem>>, vector<128x128xbf16>
    %c0_7 = arith.constant 0 : index
    %c0_8 = arith.constant 0 : index
    %10 = vector.load %arg3[%c0_7, %c0_8] : memref<128x128xbf16, #tpu.memory_space<vmem>>, vector<128x128xbf16>
    %cst = arith.constant dense<0.000000e+00> : vector<128x128xf32>
    %11 = tpu.matmul %9, %10, %cst {dimension_numbers = #tpu.dot_dimension_numbers<[1], [0], [0], [1], [0, 0, 1, 1], [], []>} : vector<128x128xbf16>, vector<128x128xbf16>, vector<128x128xf32> -> vector<128x128xf32>
    %12 = arith.addf %8, %11 : vector<128x128xf32>
    %c0_9 = arith.constant 0 : index
    %c0_10 = arith.constant 0 : index
    %13 = vector.load %arg11[%c0_9, %c0_10] : memref<128x128xf32, #tpu.memory_space<vmem>>, vector<128x128xf32>
    tpu.vector_store %arg11[%c0_9, %c0_10], %12 {strides = array<i32>} : memref<128x128xf32, #tpu.memory_space<vmem>>, vector<128x128xf32>,
    %c1_i32 = arith.constant 1 : i32
    %14 = arith.cmpi eq, %arg1, %c1_i32 : i32
    %15 = arith.extui %14 : i1 to i32
    %c0_i32_11 = arith.constant 0 : i32
    %16 = arith.cmpi ne, %15, %c0_i32_11 : i32
    scf.if %16 {
      %c0_15 = arith.constant 0 : index
      %c0_16 = arith.constant 0 : index
      %22 = vector.load %arg11[%c0_15, %c0_16] : memref<128x128xf32, #tpu.memory_space<vmem>>, vector<128x128xf32>
      %23 = arith.truncf %22 : vector<128x128xf32> to vector<128x128xbf16>
      %c0_17 = arith.constant 0 : index
      %c0_18 = arith.constant 0 : index
      %24 = vector.load %arg4[%c0_17, %c0_18] : memref<128x128xbf16, #tpu.memory_space<vmem>>, vector<128x128xbf16>
      %cst_19 = arith.constant dense<0.000000e+00> : vector<128x128xf32>
      %25 = tpu.matmul %23, %24, %cst_19 {dimension_numbers = #tpu.dot_dimension_numbers<[1], [0], [0], [1], [0, 0, 1, 1], [], []>} : vector<128x128xbf16>, vector<128x128xbf16>, vector<128x128xf32> -> vector<128x128xf32>
      %c0_20 = arith.constant 0 : index
      %c0_21 = arith.constant 0 : index
      %26 = vector.load %arg5[%c0_20, %c0_21] : memref<1x128xf32, #tpu.memory_space<vmem>>, vector<1x128xf32>
      %27 = vector.broadcast %26 : vector<1x128xf32> to vector<128x128xf32>
      %28 = arith.addf %25, %27 : vector<128x128xf32>
      %cst_22 = arith.constant 0.000000e+00 : f32
      %29 = vector.broadcast %cst_22 : f32 to vector<128x128xf32>
      %30 = arith.maximumf %28, %29 : vector<128x128xf32>
      %c0_23 = arith.constant 0 : index
      %c0_24 = arith.constant 0 : index
      %31 = vector.load %arg12[%c0_23, %c0_24] : memref<8x128xf32, #tpu.memory_space<vmem>>, vector<8x128xf32>
      %c0_25 = arith.constant 0 : index
      %c0_26 = arith.constant 0 : index
      %32 = vector.load %arg6[%c0_25, %c0_26] : memref<8x128xbf16, #tpu.memory_space<vmem>>, vector<8x128xbf16>
      %33 = arith.truncf %30 : vector<128x128xf32> to vector<128x128xbf16>
      %cst_27 = arith.constant dense<0.000000e+00> : vector<8x128xf32>
      %34 = tpu.matmul %32, %33, %cst_27 {dimension_numbers = #tpu.dot_dimension_numbers<[1], [0], [0], [1], [0, 0, 1, 1], [], []>} : vector<8x128xbf16>, vector<128x128xbf16>, vector<8x128xf32> -> vector<8x128xf32>
      %35 = arith.addf %31, %34 : vector<8x128xf32>
      %c0_28 = arith.constant 0 : index
      %c0_29 = arith.constant 0 : index
      %36 = vector.load %arg12[%c0_28, %c0_29] : memref<8x128xf32, #tpu.memory_space<vmem>>, vector<8x128xf32>
      tpu.vector_store %arg12[%c0_28, %c0_29], %35 {strides = array<i32>} : memref<8x128xf32, #tpu.memory_space<vmem>>, vector<8x128xf32>,
    } else {
    }
    %c1_i32_12 = arith.constant 1 : i32
    %17 = arith.cmpi eq, %arg0, %c1_i32_12 : i32
    %c1_i32_13 = arith.constant 1 : i32
    %18 = arith.cmpi eq, %arg1, %c1_i32_13 : i32
    %19 = arith.andi %17, %18 : i1
    %20 = arith.extui %19 : i1 to i32
    %c0_i32_14 = arith.constant 0 : i32
    %21 = arith.cmpi ne, %20, %c0_i32_14 : i32
    scf.if %21 {
      %c0_15 = arith.constant 0 : index
      %c0_16 = arith.constant 0 : index
      %22 = vector.load %arg12[%c0_15, %c0_16] : memref<8x128xf32, #tpu.memory_space<vmem>>, vector<8x128xf32>
      %23 = arith.truncf %22 : vector<8x128xf32> to vector<8x128xbf16>
      %c0_17 = arith.constant 0 : index
      %c0_18 = arith.constant 0 : index
      %24 = vector.load %arg7[%c0_17, %c0_18] : memref<128x128xbf16, #tpu.memory_space<vmem>>, vector<128x128xbf16>
      %cst_19 = arith.constant dense<0.000000e+00> : vector<8x128xf32>
      %25 = tpu.matmul %23, %24, %cst_19 {dimension_numbers = #tpu.dot_dimension_numbers<[1], [0], [0], [1], [0, 0, 1, 1], [], []>} : vector<8x128xbf16>, vector<128x128xbf16>, vector<8x128xf32> -> vector<8x128xf32>
      %c0_20 = arith.constant 0 : index
      %c0_21 = arith.constant 0 : index
      %26 = vector.load %arg8[%c0_20, %c0_21] : memref<1x128xf32, #tpu.memory_space<vmem>>, vector<1x128xf32>
      %27 = vector.broadcast %26 : vector<1x128xf32> to vector<8x128xf32>
      %28 = arith.addf %25, %27 : vector<8x128xf32>
      %c0_22 = arith.constant 0 : index
      %c0_23 = arith.constant 0 : index
      %29 = vector.load %arg10[%c0_22, %c0_23] : memref<8x128xf32, #tpu.memory_space<vmem>>, vector<8x128xf32>
      tpu.vector_store %arg10[%c0_22, %c0_23], %22 {strides = array<i32>} : memref<8x128xf32, #tpu.memory_space<vmem>>, vector<8x128xf32>,
      %c0_24 = arith.constant 0 : index
      %c0_25 = arith.constant 0 : index
      %30 = vector.load %arg9[%c0_24, %c0_25] : memref<8x128xf32, #tpu.memory_space<vmem>>, vector<8x128xf32>
      tpu.vector_store %arg9[%c0_24, %c0_25], %28 {strides = array<i32>} : memref<8x128xf32, #tpu.memory_space<vmem>>, vector<8x128xf32>,
    } else {
    }
    return
  }
  func.func @transform_0(%arg0: i32, %arg1: i32) -> (i32, i32) {
    %c0_i32 = arith.constant 0 : i32
    return %arg0, %arg1 : i32, i32
  }
  func.func @transform_1(%arg0: i32, %arg1: i32) -> (i32, i32) {
    %c0_i32 = arith.constant 0 : i32
    %c0_i32_0 = arith.constant 0 : i32
    return %arg1, %c0_i32 : i32, i32
  }
  func.func @transform_2(%arg0: i32, %arg1: i32) -> (i32, i32) {
    %c0_i32 = arith.constant 0 : i32
    %c0_i32_0 = arith.constant 0 : i32
    %c0_i32_1 = arith.constant 0 : i32
    return %c0_i32, %c0_i32_0 : i32, i32
  }
  func.func @transform_3(%arg0: i32, %arg1: i32) -> (i32, i32) {
    %c0_i32 = arith.constant 0 : i32
    %c0_i32_0 = arith.constant 0 : i32
    %c0_i32_1 = arith.constant 0 : i32
    return %c0_i32, %c0_i32_0 : i32, i32
  }
  func.func @transform_4(%arg0: i32, %arg1: i32) -> (i32, i32) {
    %c0_i32 = arith.constant 0 : i32
    %c0_i32_0 = arith.constant 0 : i32
    return %c0_i32, %arg0 : i32, i32
  }
  func.func @transform_5(%arg0: i32, %arg1: i32) -> (i32, i32) {
    %c0_i32 = arith.constant 0 : i32
    %c0_i32_0 = arith.constant 0 : i32
    %c0_i32_1 = arith.constant 0 : i32
    return %c0_i32, %c0_i32_0 : i32, i32
  }
  func.func @transform_6(%arg0: i32, %arg1: i32) -> (i32, i32) {
    %c0_i32 = arith.constant 0 : i32
    %c0_i32_0 = arith.constant 0 : i32
    %c0_i32_1 = arith.constant 0 : i32
    return %c0_i32, %c0_i32_0 : i32, i32
  }
  func.func @transform_7(%arg0: i32, %arg1: i32) -> (i32, i32) {
    %c0_i32 = arith.constant 0 : i32
    %c0_i32_0 = arith.constant 0 : i32
    %c0_i32_1 = arith.constant 0 : i32
    return %c0_i32, %c0_i32_0 : i32, i32
  }
  func.func @transform_8(%arg0: i32, %arg1: i32) -> (i32, i32) {
    %c0_i32 = arith.constant 0 : i32
    %c0_i32_0 = arith.constant 0 : i32
    %c0_i32_1 = arith.constant 0 : i32
    return %c0_i32, %c0_i32_0 : i32, i32
  }
}

</mosaic_0001>

<llo_original>
// kernel: gnn_forward.3
$region0: #{gnn_forward.3}
  #allocation0 [shape = 'u32[]', space=smem, size = 0x4, offset = 0x4, fixed_abs, tag = 'smem constant byte address 0x4 - core index']
  #allocation1 [shape = 'u32[144,128]{1,0:T(1,128)}', space=vmem, size = 0x12000, scoped, tag = 'internal scratch']
  #allocation2 [shape = 'f32[128,128]{1,0:T(8,128)}', space=vmem, size = 0x10000, scoped, tag = 'scratch operand']
  #allocation3 [shape = 'f32[8,128]{1,0:T(8,128)}', space=vmem, size = 0x1000, scoped, tag = 'scratch operand']
  %s0 = inlined_call_operand.vmem [shape: bf16[256,256], index: 0, kind: input, shape index: {}]
  %s1 = inlined_call_operand.vmem [shape: bf16[256,128], index: 1, kind: input, shape index: {}]
  %s2 = inlined_call_operand.vmem [shape: bf16[128,128], index: 2, kind: input, shape index: {}]
  %s3 = inlined_call_operand.vmem [shape: f32[1,128], index: 3, kind: input, shape index: {}]
  %s4 = inlined_call_operand.vmem [shape: bf16[8,256], index: 4, kind: input, shape index: {}]
  %s5 = inlined_call_operand.vmem [shape: bf16[128,128], index: 5, kind: input, shape index: {}]
  %s6 = inlined_call_operand.vmem [shape: f32[1,128], index: 6, kind: input, shape index: {}]
  %s7 = inlined_call_operand.vmem [shape: f32[8,128], index: 7, kind: output, shape index: {0}]
  %s8 = inlined_call_operand.hbm [shape: f32[8,128], index: 8, kind: output, shape index: {1}]
  %9 = xla_tuple %s7, %s8
  %s10 = sld [smem:[#allocation0]]
  $region126: #{gnn_forward.3} parent=0
    _
  %s12 = ssub.s32 1, %s10
  %s13 = scalar_select 0, %s12, %s10
  $region1: #{gnn_forward.3} parent=0
    #allocation4 [shape = 'u8[65536]{0}', space=vmem, size = 0x10000, scoped, tag = 'input window, operand 0']
    #allocation5 [shape = 'u8[4096]{0}', space=vmem, size = 0x1000, scoped, tag = 'output window, operand 1, single buffered']
    #allocation6 [shape = 's32[2]{0}', space=sflag, size = 0x8, scoped, tag = 'scoped memory for gnn_forward.3']
    %14 = vsyncpa [#allocation6], 0
    loop: start=0, step=1, limit=6
    $region2: #{gnn_forward.3} parent=1 // loop_pre_header
      _
    $region3: #{gnn_forward.3} parent=1 // loop_header
      %s16 = sphi 0, %s20
      %p17 = scmp.ge.s32.totalorder %s16, 6
      %s23 = sphi 0, %s35
      %s24 = sphi 0, %s31
      %s25 = sphi 0, %s23
      %s26 = sphi 0, %s24
      %s27 = sphi 0, %s25
      %s28 = sphi 0, %s26
      %s40 = sphi 0, %s42
      %s43 = sphi 0, %s40
      %s44 = sphi 0, %s43
      %s60 = sphi 0, %s44
      %s66 = sphi 0, %s68
      %s69 = sphi 0, %s66
      %s70 = sphi 0, %s69
      %s86 = sphi 0, %s70
      %s90 = sphi 0, %s90
      %s92 = sphi 0, %s90
      %s93 = sphi 0, %s92
      %s107 = sphi 0, %s93
      %s111 = sphi 0, %s111
      %s113 = sphi 0, %s111
      %s114 = sphi 0, %s113
      %s128 = sphi 0, %s114
      %s134 = sphi 0, %s136
      %s137 = sphi 0, %s134
      %s138 = sphi 0, %s137
      %s154 = sphi 0, %s138
      %s158 = sphi 0, %s158
      %s160 = sphi 0, %s158
      %s161 = sphi 0, %s160
      %s175 = sphi 0, %s161
      %s179 = sphi 0, %s179
      %s181 = sphi 0, %s179
      %s182 = sphi 0, %s181
      %s196 = sphi 0, %s182
      %s200 = sphi 0, %s200
      %s202 = sphi 0, %s200
      %s203 = sphi 0, %s202
      %s217 = sphi 0, %s203
      %s221 = sphi 0, %s221
      %s223 = sphi 0, %s221
      %s224 = sphi 0, %s223
      %s238 = sphi 0, %s224
    $region4: #{gnn_forward.3} parent=1 // loop_header_branch
      %19 = sbr.rel (%p17) target = $region8
    $region5: #{gnn_forward.3} parent=1 // loop_body
      %s21 = ssub.s32 %s16, 1
      %s22 = ssub.s32 %s16, 2
      %s29 = sadd.s32 1, %s24
      %p30 = scmp.ge.s32.totalorder %s29, 2
      %s31 = scalar_select %p30, 0, %s29
      %s32 = sadd.s32 1, %s23
      %s33 = scalar_select %p30, %s32, %s23
      %p34 = scmp.ge.s32.totalorder %s33, 2
      %s35 = scalar_select %p34, 0, %s33
      %s36 = ssub.s32 %s23, %s35
      %s37 = ssub.s32 %s24, %s31
      %s38 = sor.u32 %s36, %s37
      %p39 = scmp.eq.s32.totalorder %s38, 0
      %s41 = sadd.s32 %s40, 1
      %s42 = scalar_select %p39, %s40, %s41
      %p45 = pneg %p39
      %p46 = scmp.eq.s32.totalorder %s16, 3
      %p47 = por %p45, %p46
      %p48 = scmp.ne.s32.totalorder %s40, %s43
      %p49 = scmp.eq.s32.totalorder %s16, 0
      %p50 = por %p48, %p49
      %p51 = scmp.ne.s32.totalorder %s40, %s43
      %p52 = scmp.eq.s32.totalorder %s21, 3
      %p53 = por %p51, %p52
      %p54 = scmp.ne.s32.totalorder %s43, %s44
      %p55 = scmp.eq.s32.totalorder %s21, 0
      %p56 = por %p54, %p55
      %p57 = scmp.ne.s32.totalorder %s43, %s44
      %p58 = scmp.eq.s32.totalorder %s22, 3
      %p59 = por %p57, %p58
      %p61 = scmp.ne.s32.totalorder %s44, %s60
      %p62 = scmp.eq.s32.totalorder %s22, 0
      %p63 = por %p61, %p62
      %s64 = ssub.s32 %s24, %s31
      %p65 = scmp.eq.s32.totalorder %s64, 0
      %s67 = sadd.s32 %s66, 1
      %s68 = scalar_select %p65, %s66, %s67
      %p71 = pneg %p65
      %p72 = scmp.eq.s32.totalorder %s16, 3
      %p73 = por %p71, %p72
      %p74 = scmp.ne.s32.totalorder %s66, %s69
      %p75 = scmp.eq.s32.totalorder %s16, 0
      %p76 = por %p74, %p75
      %p77 = scmp.ne.s32.totalorder %s66, %s69
      %p78 = scmp.eq.s32.totalorder %s21, 3
      %p79 = por %p77, %p78
      %p80 = scmp.ne.s32.totalorder %s69, %s70
      %p81 = scmp.eq.s32.totalorder %s21, 0
      %p82 = por %p80, %p81
      %p83 = scmp.ne.s32.totalorder %s69, %s70
      %p84 = scmp.eq.s32.totalorder %s22, 3
      %p85 = por %p83, %p84
      %p87 = scmp.ne.s32.totalorder %s70, %s86
      %p88 = scmp.eq.s32.totalorder %s22, 0
      %p89 = por %p87, %p88
      %s91 = sadd.s32 %s90, 1
      %p94 = scmp.eq.s32.totalorder %s16, 3
      %p95 = scmp.ne.s32.totalorder %s90, %s92
      %p96 = scmp.eq.s32.totalorder %s16, 0
      %p97 = por %p95, %p96
      %p98 = scmp.ne.s32.totalorder %s90, %s92
      %p99 = scmp.eq.s32.totalorder %s21, 3
      %p100 = por %p98, %p99
      %p101 = scmp.ne.s32.totalorder %s92, %s93
      %p102 = scmp.eq.s32.totalorder %s21, 0
      %p103 = por %p101, %p102
      %p104 = scmp.ne.s32.totalorder %s92, %s93
      %p105 = scmp.eq.s32.totalorder %s22, 3
      %p106 = por %p104, %p105
      %p108 = scmp.ne.s32.totalorder %s93, %s107
      %p109 = scmp.eq.s32.totalorder %s22, 0
      %p110 = por %p108, %p109
      %s112 = sadd.s32 %s111, 1
      %p115 = scmp.eq.s32.totalorder %s16, 3
      %p116 = scmp.ne.s32.totalorder %s111, %s113
      %p117 = scmp.eq.s32.totalorder %s16, 0
      %p118 = por %p116, %p117
      %p119 = scmp.ne.s32.totalorder %s111, %s113
      %p120 = scmp.eq.s32.totalorder %s21, 3
      %p121 = por %p119, %p120
      %p122 = scmp.ne.s32.totalorder %s113, %s114
      %p123 = scmp.eq.s32.totalorder %s21, 0
      %p124 = por %p122, %p123
      %p125 = scmp.ne.s32.totalorder %s113, %s114
      %p126 = scmp.eq.s32.totalorder %s22, 3
      %p127 = por %p125, %p126
      %p129 = scmp.ne.s32.totalorder %s114, %s128
      %p130 = scmp.eq.s32.totalorder %s22, 0
      %p131 = por %p129, %p130
      %s132 = ssub.s32 %s23, %s35
      %p133 = scmp.eq.s32.totalorder %s132, 0
      %s135 = sadd.s32 %s134, 1
      %s136 = scalar_select %p133, %s134, %s135
      %p139 = pneg %p133
      %p140 = scmp.eq.s32.totalorder %s16, 3
      %p141 = por %p139, %p140
      %p142 = scmp.ne.s32.totalorder %s134, %s137
      %p143 = scmp.eq.s32.totalorder %s16, 0
      %p144 = por %p142, %p143
      %p145 = scmp.ne.s32.totalorder %s134, %s137
      %p146 = scmp.eq.s32.totalorder %s21, 3
      %p147 = por %p145, %p146
      %p148 = scmp.ne.s32.totalorder %s137, %s138
      %p149 = scmp.eq.s32.totalorder %s21, 0
      %p150 = por %p148, %p149
      %p151 = scmp.ne.s32.totalorder %s137, %s138
      %p152 = scmp.eq.s32.totalorder %s22, 3
      %p153 = por %p151, %p152
      %p155 = scmp.ne.s32.totalorder %s138, %s154
      %p156 = scmp.eq.s32.totalorder %s22, 0
      %p157 = por %p155, %p156
      %s159 = sadd.s32 %s158, 1
      %p162 = scmp.eq.s32.totalorder %s16, 3
      %p163 = scmp.ne.s32.totalorder %s158, %s160
      %p164 = scmp.eq.s32.totalorder %s16, 0
      %p165 = por %p163, %p164
      %p166 = scmp.ne.s32.totalorder %s158, %s160
      %p167 = scmp.eq.s32.totalorder %s21, 3
      %p168 = por %p166, %p167
      %p169 = scmp.ne.s32.totalorder %s160, %s161
      %p170 = scmp.eq.s32.totalorder %s21, 0
      %p171 = por %p169, %p170
      %p172 = scmp.ne.s32.totalorder %s160, %s161
      %p173 = scmp.eq.s32.totalorder %s22, 3
      %p174 = por %p172, %p173
      %p176 = scmp.ne.s32.totalorder %s161, %s175
      %p177 = scmp.eq.s32.totalorder %s22, 0
      %p178 = por %p176, %p177
      %s180 = sadd.s32 %s179, 1
      %p183 = scmp.eq.s32.totalorder %s16, 3
      %p184 = scmp.ne.s32.totalorder %s179, %s181
      %p185 = scmp.eq.s32.totalorder %s16, 0
      %p186 = por %p184, %p185
      %p187 = scmp.ne.s32.totalorder %s179, %s181
      %p188 = scmp.eq.s32.totalorder %s21, 3
      %p189 = por %p187, %p188
      %p190 = scmp.ne.s32.totalorder %s181, %s182
      %p191 = scmp.eq.s32.totalorder %s21, 0
      %p192 = por %p190, %p191
      %p193 = scmp.ne.s32.totalorder %s181, %s182
      %p194 = scmp.eq.s32.totalorder %s22, 3
      %p195 = por %p193, %p194
      %p197 = scmp.ne.s32.totalorder %s182, %s196
      %p198 = scmp.eq.s32.totalorder %s22, 0
      %p199 = por %p197, %p198
      %s201 = sadd.s32 %s200, 1
      %p204 = scmp.eq.s32.totalorder %s16, 3
      %p205 = scmp.ne.s32.totalorder %s200, %s202
      %p206 = scmp.eq.s32.totalorder %s16, 0
      %p207 = por %p205, %p206
      %p208 = scmp.ne.s32.totalorder %s200, %s202
      %p209 = scmp.eq.s32.totalorder %s21, 3
      %p210 = por %p208, %p209
      %p211 = scmp.ne.s32.totalorder %s202, %s203
      %p212 = scmp.eq.s32.totalorder %s21, 0
      %p213 = por %p211, %p212
      %p214 = scmp.ne.s32.totalorder %s202, %s203
      %p215 = scmp.eq.s32.totalorder %s22, 3
      %p216 = por %p214, %p215
      %p218 = scmp.ne.s32.totalorder %s203, %s217
      %p219 = scmp.eq.s32.totalorder %s22, 0
      %p220 = por %p218, %p219
      %s222 = sadd.s32 %s221, 1
      %p225 = scmp.eq.s32.totalorder %s16, 3
      %p226 = scmp.ne.s32.totalorder %s221, %s223
      %p227 = scmp.eq.s32.totalorder %s16, 0
      %p228 = por %p226, %p227
      %p229 = scmp.ne.s32.totalorder %s221, %s223
      %p230 = scmp.eq.s32.totalorder %s21, 3
      %p231 = por %p229, %p230
      %p232 = scmp.ne.s32.totalorder %s223, %s224
      %p233 = scmp.eq.s32.totalorder %s21, 0
      %p234 = por %p232, %p233
      %p235 = scmp.ne.s32.totalorder %s223, %s224
      %p236 = scmp.eq.s32.totalorder %s22, 3
      %p237 = por %p235, %p236
      %p239 = scmp.ne.s32.totalorder %s224, %s238
      %p240 = scmp.eq.s32.totalorder %s22, 0
      %p241 = por %p239, %p240
      %p242 = scmp.le.s32.totalorder 1, %s16
      %p243 = scmp.lt.s32.totalorder %s16, 5
      %p244 = pnand %p242, %p243
      %p245 = pneg %p244
      // Predicated region
      $region9: #{gnn_forward.3} parent=5 // pred_check
        _
      $region10: #{gnn_forward.3} parent=5 // pred_check_branch
        %247 = sbr.rel (%p244) target = $region12
      $region11: #{gnn_forward.3} parent=5 // pred_region
        %s248 = ssub.s32 %s16, 1
        // Predicated region
        $region13: #{gnn_forward.3} parent=11 // pred_check
          %p249 = pneg %p103
        $region14: #{gnn_forward.3} parent=11 // pred_check_branch
          %251 = sbr.rel (%p249) target = $region16
        $region15: #{gnn_forward.3} parent=11 // pred_region
          _
        $region16: #{gnn_forward.3} parent=11 // pred_fallthru
          _
        // Predicated region
        $region17: #{gnn_forward.3} parent=11 // pred_check
          %p252 = pneg %p124
        $region18: #{gnn_forward.3} parent=11 // pred_check_branch
          %254 = sbr.rel (%p252) target = $region20
        $region19: #{gnn_forward.3} parent=11 // pred_region
          _
        $region20: #{gnn_forward.3} parent=11 // pred_fallthru
          _
        // Predicated region
        $region21: #{gnn_forward.3} parent=11 // pred_check
          %p255 = pneg %p171
        $region22: #{gnn_forward.3} parent=11 // pred_check_branch
          %257 = sbr.rel (%p255) target = $region24
        $region23: #{gnn_forward.3} parent=11 // pred_region
          _
        $region24: #{gnn_forward.3} parent=11 // pred_fallthru
          _
        // Predicated region
        $region25: #{gnn_forward.3} parent=11 // pred_check
          %p258 = pneg %p192
        $region26: #{gnn_forward.3} parent=11 // pred_check_branch
          %260 = sbr.rel (%p258) target = $region28
        $region27: #{gnn_forward.3} parent=11 // pred_region
          _
        $region28: #{gnn_forward.3} parent=11 // pred_fallthru
          _
      $region12: #{gnn_forward.3} parent=5 // pred_fallthru
        _
      %p261 = scmp.lt.s32.totalorder %s16, 4
      // Predicated region
      $region29: #{gnn_forward.3} parent=5 // pred_check
        %p262 = pneg %p261
      $region30: #{gnn_forward.3} parent=5 // pred_check_branch
        %264 = sbr.rel (%p262) target = $region32
      $region31: #{gnn_forward.3} parent=5 // pred_region
        // Predicated region
        $region33: #{gnn_forward.3} parent=31 // pred_check
          %p265 = pneg %p50
        $region34: #{gnn_forward.3} parent=31 // pred_check_branch
          %267 = sbr.rel (%p265) target = $region36
        $region35: #{gnn_forward.3} parent=31 // pred_region
          %s268 = sand.u32 %s40, 1
          %s269 = sand.u32 %s40, 1
          %s270 = smul.addr %s269, 64
          %s271 = scalar_lea.vmem [#allocation4], %s270
          %s272 = smul.u32 16, %s23
          %s273 = smul.addr %s272, 2
          %s274 = sadd.s32 %s24, %s273
          %s275 = smul.addr %s274, 4
          %s276 = scalar_lea.vmem %s0, %s275
          // Predicated region
          $region37: #{gnn_forward.3} parent=35 // pred_check
            _
          $region38: #{gnn_forward.3} parent=35 // pred_check_branch
            %278 = sbr.rel (0) target = $region40
          $region39: #{gnn_forward.3} parent=35 // pred_region
            // Predicated region
            $region41: #{gnn_forward.3} parent=39 // pred_check
              _
            $region42: #{gnn_forward.3} parent=39 // pred_check_branch
              %280 = sbr.rel target = $region44
            $region43: #{gnn_forward.3} parent=39 // pred_region
              // Predicated region
              $region56: #{gnn_forward.3} parent=43 // pred_check
                _
              $region57: #{gnn_forward.3} parent=43 // pred_check_branch
                %325 = sbr.rel (0) target = $region59
              $region58: #{gnn_forward.3} parent=43 // pred_region
                loop: start=0, step=1, limit=1
                $region60: #{gnn_forward.3} parent=58 // loop_pre_header
                  _
                $region61: #{gnn_forward.3} parent=58 // loop_header
                  %s327 = sphi 0, %s331
                  %p328 = scmp.ge.s32.totalorder %s327, 1
                  %s332 = sphi %s276, %s276
                  %s333 = sphi %s271, %s271
                $region62: #{gnn_forward.3} parent=58 // loop_header_branch
                  %330 = sbr.rel (%p328) target = $region66
                $region63: #{gnn_forward.3} parent=58 // loop_body
                  _
                $region64: #{gnn_forward.3} parent=58 // loop_footer
                  %s331 = sadd.s32 1, %s327
                $region65: #{gnn_forward.3} parent=58 // loop_footer_branch
                  %326 = sbr.rel target = $region61
                $region66: #{gnn_forward.3} parent=58 // loop_exit
                  _
                loop: start=0, step=1, limit=1
                $region67: #{gnn_forward.3} parent=58 // loop_pre_header
                  _
                $region68: #{gnn_forward.3} parent=58 // loop_header
                  %s336 = sphi 0, %s340
                  %p337 = scmp.ge.s32.totalorder %s336, 1
                  %s341 = sphi %s276, %s276
                  %s342 = sphi %s271, %s271
                $region69: #{gnn_forward.3} parent=58 // loop_header_branch
                  %339 = sbr.rel (%p337) target = $region73
                $region70: #{gnn_forward.3} parent=58 // loop_body
                  %v343 = vld [vmem:[%s341] sm:$0xf]
                  %344 = vst [vmem:[%s342] sm:$0xf] %v343
                  %v345 = vld [vmem:[%s341 + $0x8] sm:$0xf]
                  %346 = vst [vmem:[%s342 + $0x4] sm:$0xf] %v345
                  %v347 = vld [vmem:[%s341 + $0x10] sm:$0xf]
                  %348 = vst [vmem:[%s342 + $0x8] sm:$0xf] %v347
                  %v349 = vld [vmem:[%s341 + $0x18] sm:$0xf]
                  %350 = vst [vmem:[%s342 + $0xc] sm:$0xf] %v349
                  %v351 = vld [vmem:[%s341 + $0x20] sm:$0xf]
                  %352 = vst [vmem:[%s342 + $0x10] sm:$0xf] %v351
                  %v353 = vld [vmem:[%s341 + $0x28] sm:$0xf]
                  %354 = vst [vmem:[%s342 + $0x14] sm:$0xf] %v353
                  %v355 = vld [vmem:[%s341 + $0x30] sm:$0xf]
                  %356 = vst [vmem:[%s342 + $0x18] sm:$0xf] %v355
                  %v357 = vld [vmem:[%s341 + $0x38] sm:$0xf]
                  %358 = vst [vmem:[%s342 + $0x1c] sm:$0xf] %v357
                  %v359 = vld [vmem:[%s341 + $0x40] sm:$0xf]
                  %360 = vst [vmem:[%s342 + $0x20] sm:$0xf] %v359
                  %v361 = vld [vmem:[%s341 + $0x48] sm:$0xf]
                  %362 = vst [vmem:[%s342 + $0x24] sm:$0xf] %v361
                  %v363 = vld [vmem:[%s341 + $0x50] sm:$0xf]
                  %364 = vst [vmem:[%s342 + $0x28] sm:$0xf] %v363
                  %v365 = vld [vmem:[%s341 + $0x58] sm:$0xf]
                  %366 = vst [vmem:[%s342 + $0x2c] sm:$0xf] %v365
                  %v367 = vld [vmem:[%s341 + $0x60] sm:$0xf]
                  %368 = vst [vmem:[%s342 + $0x30] sm:$0xf] %v367
                  %v369 = vld [vmem:[%s341 + $0x68] sm:$0xf]
                  %370 = vst [vmem:[%s342 + $0x34] sm:$0xf] %v369
                  %v371 = vld [vmem:[%s341 + $0x70] sm:$0xf]
                  %372 = vst [vmem:[%s342 + $0x38] sm:$0xf] %v371
                  %v373 = vld [vmem:[%s341 + $0x78] sm:$0xf]
                  %374 = vst [vmem:[%s342 + $0x3c] sm:$0xf] %v373
                $region71: #{gnn_forward.3} parent=58 // loop_footer
                  %s340 = sadd.s32 1, %s336
                $region72: #{gnn_forward.3} parent=58 // loop_footer_branch
                  %335 = sbr.rel target = $region68
                $region73: #{gnn_forward.3} parent=58 // loop_exit
                  _
              $region59: #{gnn_forward.3} parent=43 // pred_fallthru
                _
            $region44: #{gnn_forward.3} parent=39 // pred_fallthru
              _
            // Predicated region
            $region45: #{gnn_forward.3} parent=39 // pred_check
              _
            $region46: #{gnn_forward.3} parent=39 // pred_check_branch
              %282 = sbr.rel (0) target = $region48
            $region47: #{gnn_forward.3} parent=39 // pred_region
              loop: start=0, step=1, limit=1
              $region49: #{gnn_forward.3} parent=47 // loop_pre_header
                _
              $region50: #{gnn_forward.3} parent=47 // loop_header
                %s285 = sphi 0, %s289
                %p286 = scmp.ge.s32.totalorder %s285, 1
                %s290 = sphi %s276, %s276
                %s291 = sphi %s271, %s271
              $region51: #{gnn_forward.3} parent=47 // loop_header_branch
                %288 = sbr.rel (%p286) target = $region55
              $region52: #{gnn_forward.3} parent=47 // loop_body
                %v292 = vld [vmem:[%s290] sm:$0xf]
                %293 = vst [vmem:[%s291] sm:$0xf] %v292
                %v294 = vld [vmem:[%s290 + $0x8] sm:$0xf]
                %295 = vst [vmem:[%s291 + $0x4] sm:$0xf] %v294
                %v296 = vld [vmem:[%s290 + $0x10] sm:$0xf]
                %297 = vst [vmem:[%s291 + $0x8] sm:$0xf] %v296
                %v298 = vld [vmem:[%s290 + $0x18] sm:$0xf]
                %299 = vst [vmem:[%s291 + $0xc] sm:$0xf] %v298
                %v300 = vld [vmem:[%s290 + $0x20] sm:$0xf]
                %301 = vst [vmem:[%s291 + $0x10] sm:$0xf] %v300
                %v302 = vld [vmem:[%s290 + $0x28] sm:$0xf]
                %303 = vst [vmem:[%s291 + $0x14] sm:$0xf] %v302
                %v304 = vld [vmem:[%s290 + $0x30] sm:$0xf]
                %305 = vst [vmem:[%s291 + $0x18] sm:$0xf] %v304
                %v306 = vld [vmem:[%s290 + $0x38] sm:$0xf]
                %307 = vst [vmem:[%s291 + $0x1c] sm:$0xf] %v306
                %v308 = vld [vmem:[%s290 + $0x40] sm:$0xf]
                %309 = vst [vmem:[%s291 + $0x20] sm:$0xf] %v308
                %v310 = vld [vmem:[%s290 + $0x48] sm:$0xf]
                %311 = vst [vmem:[%s291 + $0x24] sm:$0xf] %v310
                %v312 = vld [vmem:[%s290 + $0x50] sm:$0xf]
                %313 = vst [vmem:[%s291 + $0x28] sm:$0xf] %v312
                %v314 = vld [vmem:[%s290 + $0x58] sm:$0xf]
                %315 = vst [vmem:[%s291 + $0x2c] sm:$0xf] %v314
                %v316 = vld [vmem:[%s290 + $0x60] sm:$0xf]
                %317 = vst [vmem:[%s291 + $0x30] sm:$0xf] %v316
                %v318 = vld [vmem:[%s290 + $0x68] sm:$0xf]
                %319 = vst [vmem:[%s291 + $0x34] sm:$0xf] %v318
                %v320 = vld [vmem:[%s290 + $0x70] sm:$0xf]
                %321 = vst [vmem:[%s291 + $0x38] sm:$0xf] %v320
                %v322 = vld [vmem:[%s290 + $0x78] sm:$0xf]
                %323 = vst [vmem:[%s291 + $0x3c] sm:$0xf] %v322
              $region53: #{gnn_forward.3} parent=47 // loop_footer
                %s289 = sadd.s32 1, %s285
              $region54: #{gnn_forward.3} parent=47 // loop_footer_branch
                %284 = sbr.rel target = $region50
              $region55: #{gnn_forward.3} parent=47 // loop_exit
                _
            $region48: #{gnn_forward.3} parent=39 // pred_fallthru
              _
          $region40: #{gnn_forward.3} parent=35 // pred_fallthru
            _
          %375 = vnop
        $region36: #{gnn_forward.3} parent=31 // pred_fallthru
          _
        // Predicated region
        $region74: #{gnn_forward.3} parent=31 // pred_check
          %p376 = pneg %p76
        $region75: #{gnn_forward.3} parent=31 // pred_check_branch
          %378 = sbr.rel (%p376) target = $region77
        $region76: #{gnn_forward.3} parent=31 // pred_region
          %s379 = smul.u32 16, %s24
          %p380 = scmp.lt.s32.totalorder %s379, 31
          %s381 = scalar_select %p380, %s379, 31
          %s382 = smul.addr %s381, 4
          %s383 = scalar_lea.vmem %s1, %s382
          %s384 = smul.u32 16, %s24
        $region77: #{gnn_forward.3} parent=31 // pred_fallthru
          _
        // Predicated region
        $region78: #{gnn_forward.3} parent=31 // pred_check
          %p385 = pneg %p144
        $region79: #{gnn_forward.3} parent=31 // pred_check_branch
          %387 = sbr.rel (%p385) target = $region81
        $region80: #{gnn_forward.3} parent=31 // pred_region
          %p388 = scmp.lt.s32.totalorder %s23, 1
          %s389 = scalar_select %p388, %s23, 1
          %s390 = smul.addr %s389, 4
          %s391 = scalar_lea.vmem %s4, %s390
        $region81: #{gnn_forward.3} parent=31 // pred_fallthru
          _
      $region32: #{gnn_forward.3} parent=5 // pred_fallthru
        _
      %p392 = scmp.le.s32.totalorder 1, %s16
      %p393 = scmp.lt.s32.totalorder %s16, 5
      %p394 = pnand %p392, %p393
      %p395 = pneg %p394
      // Predicated region
      $region82: #{gnn_forward.3} parent=5 // pred_check
        _
      $region83: #{gnn_forward.3} parent=5 // pred_check_branch
        %397 = sbr.rel (%p394) target = $region85
      $region84: #{gnn_forward.3} parent=5 // pred_region
        %s398 = ssub.s32 %s16, 1
        %s399 = sand.u32 %s43, 1
        %s400 = sand.u32 %s43, 1
        %s401 = smul.addr %s400, 64
        %s402 = scalar_lea.vmem [#allocation4], %s401
        // Predicated region
        $region86: #{gnn_forward.3} parent=84 // pred_check
          %p403 = pneg %p56
        $region87: #{gnn_forward.3} parent=84 // pred_check_branch
          %405 = sbr.rel (%p403) target = $region89
        $region88: #{gnn_forward.3} parent=84 // pred_region
          _
        $region89: #{gnn_forward.3} parent=84 // pred_fallthru
          _
        %s406 = sand.u32 %s43, 1
        %s407 = sand.u32 %s43, 1
        %s408 = smul.addr %s407, 64
        %s409 = scalar_lea.vmem [#allocation4], %s408
        %p410 = pneg %p56
        %p411 = pneg %p53
        %s412 = smul.u32 16, %s26
        %p413 = scmp.lt.s32.totalorder %s412, 31
        %s414 = scalar_select %p413, %s412, 31
        %s415 = smul.addr %s414, 4
        %s416 = scalar_lea.vmem %s1, %s415
        %p417 = pneg %p82
        %p418 = pneg %p79
        %p419 = pneg %p103
        %p420 = pneg %p100
        %p421 = pneg %p124
        %p422 = pneg %p121
        %p423 = scmp.lt.s32.totalorder %s25, 1
        %s424 = scalar_select %p423, %s25, 1
        %s425 = smul.addr %s424, 4
        %s426 = scalar_lea.vmem %s4, %s425
        %p427 = pneg %p150
        %p428 = pneg %p147
        %p429 = pneg %p171
        %p430 = pneg %p168
        %p431 = pneg %p192
        %p432 = pneg %p189
        %p433 = pneg %p213
        %p434 = pneg %p210
        %p435 = pneg %p234
        %p436 = pneg %p231
        %s437 = smul.u32 16, %s25
        %s438 = smul.u32 16, %s26
        %p439 = scmp.lt.s32.totalorder %s438, 31
        %s440 = scalar_select %p439, %s438, 31
        %s441 = smul.addr %s440, 4
        %s442 = scalar_lea.vmem %s1, %s441
        %s443 = smul.u32 16, %s26
        %p444 = scmp.lt.s32.totalorder %s25, 1
        %s445 = scalar_select %p444, %s25, 1
        %s446 = smul.addr %s445, 4
        %s447 = scalar_lea.vmem %s4, %s446
        %p449 = scmp.eq.s32.totalorder %s25, 0
        %p450 = scmp.eq.s32.totalorder %s26, 0
        %p451 = pnand %p449, %p450
        %p452 = pneg %p451
        // Predicated region
        $region90: #{gnn_forward.3} parent=84 // pred_check
          _
        $region91: #{gnn_forward.3} parent=84 // pred_check_branch
          %454 = sbr.rel (%p451) target = $region93
        $region92: #{gnn_forward.3} parent=84 // pred_region
          %455 = vst [vmem:[#allocation3] sm:$0xff] 0.0
        $region93: #{gnn_forward.3} parent=84 // pred_fallthru
          _
        // Predicated region
        $region94: #{gnn_forward.3} parent=84 // pred_check
          %p456 = pneg %p450
        $region95: #{gnn_forward.3} parent=84 // pred_check_branch
          %458 = sbr.rel (%p456) target = $region97
        $region96: #{gnn_forward.3} parent=84 // pred_region
          %459 = vst [vmem:[#allocation2] sm:$0xff] 0.0
          %460 = vst [vmem:[#allocation2 + $0x8] sm:$0xff] 0.0
          %461 = vst [vmem:[#allocation2 + $0x10] sm:$0xff] 0.0
          %462 = vst [vmem:[#allocation2 + $0x18] sm:$0xff] 0.0
          %463 = vst [vmem:[#allocation2 + $0x20] sm:$0xff] 0.0
          %464 = vst [vmem:[#allocation2 + $0x28] sm:$0xff] 0.0
          %465 = vst [vmem:[#allocation2 + $0x30] sm:$0xff] 0.0
          %466 = vst [vmem:[#allocation2 + $0x38] sm:$0xff] 0.0
          %467 = vst [vmem:[#allocation2 + $0x40] sm:$0xff] 0.0
          %468 = vst [vmem:[#allocation2 + $0x48] sm:$0xff] 0.0
          %469 = vst [vmem:[#allocation2 + $0x50] sm:$0xff] 0.0
          %470 = vst [vmem:[#allocation2 + $0x58] sm:$0xff] 0.0
          %471 = vst [vmem:[#allocation2 + $0x60] sm:$0xff] 0.0
          %472 = vst [vmem:[#allocation2 + $0x68] sm:$0xff] 0.0
          %473 = vst [vmem:[#allocation2 + $0x70] sm:$0xff] 0.0
          %474 = vst [vmem:[#allocation2 + $0x78] sm:$0xff] 0.0
        $region97: #{gnn_forward.3} parent=84 // pred_fallthru
          _
        %v475 = vld [vmem:[#allocation2] sm:$0xff]
        %v476 = vld [vmem:[#allocation2 + $0x8] sm:$0xff]
        %v477 = vld [vmem:[#allocation2 + $0x10] sm:$0xff]
        %v478 = vld [vmem:[#allocation2 + $0x18] sm:$0xff]
        %v479 = vld [vmem:[#allocation2 + $0x20] sm:$0xff]
        %v480 = vld [vmem:[#allocation2 + $0x28] sm:$0xff]
        %v481 = vld [vmem:[#allocation2 + $0x30] sm:$0xff]
        %v482 = vld [vmem:[#allocation2 + $0x38] sm:$0xff]
        %v483 = vld [vmem:[#allocation2 + $0x40] sm:$0xff]
        %v484 = vld [vmem:[#allocation2 + $0x48] sm:$0xff]
        %v485 = vld [vmem:[#allocation2 + $0x50] sm:$0xff]
        %v486 = vld [vmem:[#allocation2 + $0x58] sm:$0xff]
        %v487 = vld [vmem:[#allocation2 + $0x60] sm:$0xff]
        %v488 = vld [vmem:[#allocation2 + $0x68] sm:$0xff]
        %v489 = vld [vmem:[#allocation2 + $0x70] sm:$0xff]
        %v490 = vld [vmem:[#allocation2 + $0x78] sm:$0xff]
        %v491 = vld [vmem:[%s402] sm:$0xf]
        %v492 = vld [vmem:[%s402 + $0x4] sm:$0xf]
        %v493 = vld [vmem:[%s402 + $0x8] sm:$0xf]
        %v494 = vld [vmem:[%s402 + $0xc] sm:$0xf]
        %v495 = vld [vmem:[%s402 + $0x10] sm:$0xf]
        %v496 = vld [vmem:[%s402 + $0x14] sm:$0xf]
        %v497 = vld [vmem:[%s402 + $0x18] sm:$0xf]
        %v498 = vld [vmem:[%s402 + $0x1c] sm:$0xf]
        %v499 = vld [vmem:[%s402 + $0x20] sm:$0xf]
        %v500 = vld [vmem:[%s402 + $0x24] sm:$0xf]
        %v501 = vld [vmem:[%s402 + $0x28] sm:$0xf]
        %v502 = vld [vmem:[%s402 + $0x2c] sm:$0xf]
        %v503 = vld [vmem:[%s402 + $0x30] sm:$0xf]
        %v504 = vld [vmem:[%s402 + $0x34] sm:$0xf]
        %v505 = vld [vmem:[%s402 + $0x38] sm:$0xf]
        %v506 = vld [vmem:[%s402 + $0x3c] sm:$0xf]
        %v507 = vld [vmem:[%s442] sm:$0xf]
        %v508 = vld [vmem:[%s442 + $0x4] sm:$0xf]
        %v509 = vld [vmem:[%s442 + $0x8] sm:$0xf]
        %v510 = vld [vmem:[%s442 + $0xc] sm:$0xf]
        %v511 = vld [vmem:[%s442 + $0x10] sm:$0xf]
        %v512 = vld [vmem:[%s442 + $0x14] sm:$0xf]
        %v513 = vld [vmem:[%s442 + $0x18] sm:$0xf]
        %v514 = vld [vmem:[%s442 + $0x1c] sm:$0xf]
        %v515 = vld [vmem:[%s442 + $0x20] sm:$0xf]
        %v516 = vld [vmem:[%s442 + $0x24] sm:$0xf]
        %v517 = vld [vmem:[%s442 + $0x28] sm:$0xf]
        %v518 = vld [vmem:[%s442 + $0x2c] sm:$0xf]
        %v519 = vld [vmem:[%s442 + $0x30] sm:$0xf]
        %v520 = vld [vmem:[%s442 + $0x34] sm:$0xf]
        %v521 = vld [vmem:[%s442 + $0x38] sm:$0xf]
        %v522 = vld [vmem:[%s442 + $0x3c] sm:$0xf]
        %v539 = vunpack.c.l.b16 %v491
        %v540 = vunpack.c.l.b16 %v492
        %v541 = vunpack.c.l.b16 %v493
        %v542 = vunpack.c.l.b16 %v494
        %v543 = vunpack.c.l.b16 %v495
        %v544 = vunpack.c.l.b16 %v496
        %v545 = vunpack.c.l.b16 %v497
        %v546 = vunpack.c.l.b16 %v498
        %v547 = vunpack.c.l.b16 %v499
        %v548 = vunpack.c.l.b16 %v500
        %v549 = vunpack.c.l.b16 %v501
        %v550 = vunpack.c.l.b16 %v502
        %v551 = vunpack.c.l.b16 %v503
        %v552 = vunpack.c.l.b16 %v504
        %v553 = vunpack.c.l.b16 %v505
        %v554 = vunpack.c.l.b16 %v506
        %v555 = vpack.c.b16 %v540, %v539
        %v556 = vpack.c.b16 %v542, %v541
        %v557 = vpack.c.b16 %v544, %v543
        %v558 = vpack.c.b16 %v546, %v545
        %v559 = vpack.c.b16 %v548, %v547
        %v560 = vpack.c.b16 %v550, %v549
        %v561 = vpack.c.b16 %v552, %v551
        %v562 = vpack.c.b16 %v554, %v553
        %v587 = vunpack.c.l.b16 %v507
        %v588 = vunpack.c.l.b16 %v508
        %v589 = vunpack.c.l.b16 %v509
        %v590 = vunpack.c.l.b16 %v510
        %v591 = vunpack.c.l.b16 %v511
        %v592 = vunpack.c.l.b16 %v512
        %v593 = vunpack.c.l.b16 %v513
        %v594 = vunpack.c.l.b16 %v514
        %v595 = vunpack.c.l.b16 %v515
        %v596 = vunpack.c.l.b16 %v516
        %v597 = vunpack.c.l.b16 %v517
        %v598 = vunpack.c.l.b16 %v518
        %v599 = vunpack.c.l.b16 %v519
        %v600 = vunpack.c.l.b16 %v520
        %v601 = vunpack.c.l.b16 %v521
        %v602 = vunpack.c.l.b16 %v522
        %v603 = vpack.c.b16 %v588, %v587
        %v604 = vpack.c.b16 %v590, %v589
        %v605 = vpack.c.b16 %v592, %v591
        %v606 = vpack.c.b16 %v594, %v593
        %v607 = vpack.c.b16 %v596, %v595
        %v608 = vpack.c.b16 %v598, %v597
        %v609 = vpack.c.b16 %v600, %v599
        %v610 = vpack.c.b16 %v602, %v601
        %619 = vmatprep.subr.bf16.mxu0 0
        %620 = vmatpush1.bf16.msra.mxu0 %v603
        %621 = vmatprep.subr.bf16.mxu0 0
        %622 = vmatpush1.bf16.msra.mxu0 %v604
        %623 = vmatprep.subr.bf16.mxu0 0
        %624 = vmatpush1.bf16.msra.mxu0 %v605
        %625 = vmatprep.subr.bf16.mxu0 0
        %626 = vmatpush1.bf16.msra.mxu0 %v606
        %627 = vmatprep.subr.bf16.mxu0 0
        %628 = vmatpush1.bf16.msra.mxu0 %v607
        %629 = vmatprep.subr.bf16.mxu0 0
        %630 = vmatpush1.bf16.msra.mxu0 %v608
        %631 = vmatprep.subr.bf16.mxu0 0
        %632 = vmatpush1.bf16.msra.mxu0 %v609
        %633 = vmatprep.subr.bf16.mxu0 0
        %634 = vmatpush1.bf16.msra.mxu0 %v610
        %635 = vmatprep.subr.bf16.mxu0 0
        %636 = vmatpush1.bf16.msra.mxu0 0
        %637 = vmatprep.subr.bf16.mxu0 0
        %638 = vmatpush1.bf16.msra.mxu0 0
        %639 = vmatprep.subr.bf16.mxu0 0
        %640 = vmatpush1.bf16.msra.mxu0 0
        %641 = vmatprep.subr.bf16.mxu0 0
        %642 = vmatpush1.bf16.msra.mxu0 0
        %643 = vmatprep.subr.bf16.mxu0 0
        %644 = vmatpush1.bf16.msra.mxu0 0
        %645 = vmatprep.subr.bf16.mxu0 0
        %646 = vmatpush1.bf16.msra.mxu0 0
        %647 = vmatprep.subr.bf16.mxu0 0
        %648 = vmatpush1.bf16.msra.mxu0 0
        %649 = vmatprep.subr.bf16.mxu0 0
        %650 = vmatpush1.bf16.msra.mxu0 0
        %651 = vmatprep.mubr.bf16.mxu0 0
        %652 = vmatmul.mubr.bf16.gmra.mrb[0].mxu0 %v555
        %v653 = vpop.f32.mrb[0].mxu0
        %v654 = vadd.f32 0.0, %v653
        %v655 = vpop.f32.mrb[0].mxu0
        %v656 = vpop.f32.mrb[0].mxu0
        %v657 = vadd.f32 0.0, %v656
        %v658 = vpop.f32.mrb[0].mxu0
        %659 = vmatprep.mubr.bf16.mxu0 0
        %660 = vmatmul.mubr.bf16.gmra.mrb[0].mxu0 %v556
        %v661 = vpop.f32.mrb[0].mxu0
        %v662 = vadd.f32 0.0, %v661
        %v663 = vpop.f32.mrb[0].mxu0
        %v664 = vpop.f32.mrb[0].mxu0
        %v665 = vadd.f32 0.0, %v664
        %v666 = vpop.f32.mrb[0].mxu0
        %667 = vmatprep.mubr.bf16.mxu0 0
        %668 = vmatmul.mubr.bf16.gmra.mrb[0].mxu0 %v557
        %v669 = vpop.f32.mrb[0].mxu0
        %v670 = vadd.f32 0.0, %v669
        %v671 = vpop.f32.mrb[0].mxu0
        %v672 = vpop.f32.mrb[0].mxu0
        %v673 = vadd.f32 0.0, %v672
        %v674 = vpop.f32.mrb[0].mxu0
        %675 = vmatprep.mubr.bf16.mxu0 0
        %676 = vmatmul.mubr.bf16.gmra.mrb[0].mxu0 %v558
        %v677 = vpop.f32.mrb[0].mxu0
        %v678 = vadd.f32 0.0, %v677
        %v679 = vpop.f32.mrb[0].mxu0
        %v680 = vpop.f32.mrb[0].mxu0
        %v681 = vadd.f32 0.0, %v680
        %v682 = vpop.f32.mrb[0].mxu0
        %683 = vmatprep.mubr.bf16.mxu0 0
        %684 = vmatmul.mubr.bf16.gmra.mrb[0].mxu0 %v559
        %v685 = vpop.f32.mrb[0].mxu0
        %v686 = vadd.f32 0.0, %v685
        %v687 = vpop.f32.mrb[0].mxu0
        %v688 = vpop.f32.mrb[0].mxu0
        %v689 = vadd.f32 0.0, %v688
        %v690 = vpop.f32.mrb[0].mxu0
        %691 = vmatprep.mubr.bf16.mxu0 0
        %692 = vmatmul.mubr.bf16.gmra.mrb[0].mxu0 %v560
        %v693 = vpop.f32.mrb[0].mxu0
        %v694 = vadd.f32 0.0, %v693
        %v695 = vpop.f32.mrb[0].mxu0
        %v696 = vpop.f32.mrb[0].mxu0
        %v697 = vadd.f32 0.0, %v696
        %v698 = vpop.f32.mrb[0].mxu0
        %699 = vmatprep.mubr.bf16.mxu0 0
        %700 = vmatmul.mubr.bf16.gmra.mrb[0].mxu0 %v561
        %v701 = vpop.f32.mrb[0].mxu0
        %v702 = vadd.f32 0.0, %v701
        %v703 = vpop.f32.mrb[0].mxu0
        %v704 = vpop.f32.mrb[0].mxu0
        %v705 = vadd.f32 0.0, %v704
        %v706 = vpop.f32.mrb[0].mxu0
        %707 = vmatprep.mubr.bf16.mxu0 0
        %708 = vmatmul.mubr.bf16.gmra.mrb[0].mxu0 %v562
        %v709 = vpop.f32.mrb[0].mxu0
        %v710 = vadd.f32 0.0, %v709
        %v711 = vpop.f32.mrb[0].mxu0
        %v712 = vpop.f32.mrb[0].mxu0
        %v713 = vadd.f32 0.0, %v712
        %v714 = vpop.f32.mrb[0].mxu0
        %715 = vdwg.mxu0
        %v716 = vadd.f32 %v475, %v654
        %v717 = vadd.f32 %v476, %v657
        %v718 = vadd.f32 %v477, %v662
        %v719 = vadd.f32 %v478, %v665
        %v720 = vadd.f32 %v479, %v670
        %v721 = vadd.f32 %v480, %v673
        %v722 = vadd.f32 %v481, %v678
        %v723 = vadd.f32 %v482, %v681
        %v724 = vadd.f32 %v483, %v686
        %v725 = vadd.f32 %v484, %v689
        %v726 = vadd.f32 %v485, %v694
        %v727 = vadd.f32 %v486, %v697
        %v728 = vadd.f32 %v487, %v702
        %v729 = vadd.f32 %v488, %v705
        %v730 = vadd.f32 %v489, %v710
        %v731 = vadd.f32 %v490, %v713
        %732 = vst [vmem:[#allocation2] sm:$0xff] %v716
        %733 = vst [vmem:[#allocation2 + $0x8] sm:$0xff] %v717
        %734 = vst [vmem:[#allocation2 + $0x10] sm:$0xff] %v718
        %735 = vst [vmem:[#allocation2 + $0x18] sm:$0xff] %v719
        %736 = vst [vmem:[#allocation2 + $0x20] sm:$0xff] %v720
        %737 = vst [vmem:[#allocation2 + $0x28] sm:$0xff] %v721
        %738 = vst [vmem:[#allocation2 + $0x30] sm:$0xff] %v722
        %739 = vst [vmem:[#allocation2 + $0x38] sm:$0xff] %v723
        %740 = vst [vmem:[#allocation2 + $0x40] sm:$0xff] %v724
        %741 = vst [vmem:[#allocation2 + $0x48] sm:$0xff] %v725
        %742 = vst [vmem:[#allocation2 + $0x50] sm:$0xff] %v726
        %743 = vst [vmem:[#allocation2 + $0x58] sm:$0xff] %v727
        %744 = vst [vmem:[#allocation2 + $0x60] sm:$0xff] %v728
        %745 = vst [vmem:[#allocation2 + $0x68] sm:$0xff] %v729
        %746 = vst [vmem:[#allocation2 + $0x70] sm:$0xff] %v730
        %747 = vst [vmem:[#allocation2 + $0x78] sm:$0xff] %v731
        %p748 = scmp.eq.s32.totalorder %s26, 1
        // Predicated region
        $region98: #{gnn_forward.3} parent=84 // pred_check
          %p749 = pneg %p748
        $region99: #{gnn_forward.3} parent=84 // pred_check_branch
          %751 = sbr.rel (%p749) target = $region101
        $region100: #{gnn_forward.3} parent=84 // pred_region
          %v752 = vld [vmem:[#allocation2] sm:$0xff]
          %v753 = vld [vmem:[#allocation2 + $0x8] sm:$0xff]
          %v754 = vld [vmem:[#allocation2 + $0x10] sm:$0xff]
          %v755 = vld [vmem:[#allocation2 + $0x18] sm:$0xff]
          %v756 = vld [vmem:[#allocation2 + $0x20] sm:$0xff]
          %v757 = vld [vmem:[#allocation2 + $0x28] sm:$0xff]
          %v758 = vld [vmem:[#allocation2 + $0x30] sm:$0xff]
          %v759 = vld [vmem:[#allocation2 + $0x38] sm:$0xff]
          %v760 = vld [vmem:[#allocation2 + $0x40] sm:$0xff]
          %v761 = vld [vmem:[#allocation2 + $0x48] sm:$0xff]
          %v762 = vld [vmem:[#allocation2 + $0x50] sm:$0xff]
          %v763 = vld [vmem:[#allocation2 + $0x58] sm:$0xff]
          %v764 = vld [vmem:[#allocation2 + $0x60] sm:$0xff]
          %v765 = vld [vmem:[#allocation2 + $0x68] sm:$0xff]
          %v766 = vld [vmem:[#allocation2 + $0x70] sm:$0xff]
          %v767 = vld [vmem:[#allocation2 + $0x78] sm:$0xff]
          %v768 = vpack.c.bf16 %v753, %v752
          %v769 = vpack.c.bf16 %v755, %v754
          %v770 = vpack.c.bf16 %v757, %v756
          %v771 = vpack.c.bf16 %v759, %v758
          %v772 = vpack.c.bf16 %v761, %v760
          %v773 = vpack.c.bf16 %v763, %v762
          %v774 = vpack.c.bf16 %v765, %v764
          %v775 = vpack.c.bf16 %v767, %v766
          %v776 = vld [vmem:[%s2] sm:$0xf]
          %v777 = vld [vmem:[%s2 + $0x4] sm:$0xf]
          %v778 = vld [vmem:[%s2 + $0x8] sm:$0xf]
          %v779 = vld [vmem:[%s2 + $0xc] sm:$0xf]
          %v780 = vld [vmem:[%s2 + $0x10] sm:$0xf]
          %v781 = vld [vmem:[%s2 + $0x14] sm:$0xf]
          %v782 = vld [vmem:[%s2 + $0x18] sm:$0xf]
          %v783 = vld [vmem:[%s2 + $0x1c] sm:$0xf]
          %v784 = vld [vmem:[%s2 + $0x20] sm:$0xf]
          %v785 = vld [vmem:[%s2 + $0x24] sm:$0xf]
          %v786 = vld [vmem:[%s2 + $0x28] sm:$0xf]
          %v787 = vld [vmem:[%s2 + $0x2c] sm:$0xf]
          %v788 = vld [vmem:[%s2 + $0x30] sm:$0xf]
          %v789 = vld [vmem:[%s2 + $0x34] sm:$0xf]
          %v790 = vld [vmem:[%s2 + $0x38] sm:$0xf]
          %v791 = vld [vmem:[%s2 + $0x3c] sm:$0xf]
          %v792 = vld [vmem:[%s3] sm:$0x1]
          %v794 = vlaneseq
          %v795 = vshrl.u32 %v794, 7
          %v796 = vsub.s32 0, %v795
          %v797 = vrot.slane %v792, %v796
          %v815 = vunpack.c.l.b16 %v776
          %v816 = vunpack.c.l.b16 %v777
          %v817 = vunpack.c.l.b16 %v778
          %v818 = vunpack.c.l.b16 %v779
          %v819 = vunpack.c.l.b16 %v780
          %v820 = vunpack.c.l.b16 %v781
          %v821 = vunpack.c.l.b16 %v782
          %v822 = vunpack.c.l.b16 %v783
          %v823 = vunpack.c.l.b16 %v784
          %v824 = vunpack.c.l.b16 %v785
          %v825 = vunpack.c.l.b16 %v786
          %v826 = vunpack.c.l.b16 %v787
          %v827 = vunpack.c.l.b16 %v788
          %v828 = vunpack.c.l.b16 %v789
          %v829 = vunpack.c.l.b16 %v790
          %v830 = vunpack.c.l.b16 %v791
          %v831 = vpack.c.b16 %v816, %v815
          %v832 = vpack.c.b16 %v818, %v817
          %v833 = vpack.c.b16 %v820, %v819
          %v834 = vpack.c.b16 %v822, %v821
          %v835 = vpack.c.b16 %v824, %v823
          %v836 = vpack.c.b16 %v826, %v825
          %v837 = vpack.c.b16 %v828, %v827
          %v838 = vpack.c.b16 %v830, %v829
          %847 = vmatprep.subr.bf16.mxu0 0
          %848 = vmatpush1.bf16.msra.mxu0 %v831
          %849 = vmatprep.subr.bf16.mxu0 0
          %850 = vmatpush1.bf16.msra.mxu0 %v832
          %851 = vmatprep.subr.bf16.mxu0 0
          %852 = vmatpush1.bf16.msra.mxu0 %v833
          %853 = vmatprep.subr.bf16.mxu0 0
          %854 = vmatpush1.bf16.msra.mxu0 %v834
          %855 = vmatprep.subr.bf16.mxu0 0
          %856 = vmatpush1.bf16.msra.mxu0 %v835
          %857 = vmatprep.subr.bf16.mxu0 0
          %858 = vmatpush1.bf16.msra.mxu0 %v836
          %859 = vmatprep.subr.bf16.mxu0 0
          %860 = vmatpush1.bf16.msra.mxu0 %v837
          %861 = vmatprep.subr.bf16.mxu0 0
          %862 = vmatpush1.bf16.msra.mxu0 %v838
          %863 = vmatprep.subr.bf16.mxu0 0
          %864 = vmatpush1.bf16.msra.mxu0 0
          %865 = vmatprep.subr.bf16.mxu0 0
          %866 = vmatpush1.bf16.msra.mxu0 0
          %867 = vmatprep.subr.bf16.mxu0 0
          %868 = vmatpush1.bf16.msra.mxu0 0
          %869 = vmatprep.subr.bf16.mxu0 0
          %870 = vmatpush1.bf16.msra.mxu0 0
          %871 = vmatprep.subr.bf16.mxu0 0
          %872 = vmatpush1.bf16.msra.mxu0 0
          %873 = vmatprep.subr.bf16.mxu0 0
          %874 = vmatpush1.bf16.msra.mxu0 0
          %875 = vmatprep.subr.bf16.mxu0 0
          %876 = vmatpush1.bf16.msra.mxu0 0
          %877 = vmatprep.subr.bf16.mxu0 0
          %878 = vmatpush1.bf16.msra.mxu0 0
          %879 = vmatprep.mubr.bf16.mxu0 0
          %880 = vmatmul.mubr.bf16.gmra.mrb[0].mxu0 %v768
          %v881 = vpop.f32.mrb[0].mxu0
          %v882 = vadd.f32 %v797, %v881
          %v883 = vpop.f32.mrb[0].mxu0
          %v884 = vpop.f32.mrb[0].mxu0
          %v885 = vadd.f32 %v797, %v884
          %v886 = vpop.f32.mrb[0].mxu0
          %887 = vmatprep.mubr.bf16.mxu0 0
          %888 = vmatmul.mubr.bf16.gmra.mrb[0].mxu0 %v769
          %v889 = vpop.f32.mrb[0].mxu0
          %v890 = vadd.f32 %v797, %v889
          %v891 = vpop.f32.mrb[0].mxu0
          %v892 = vpop.f32.mrb[0].mxu0
          %v893 = vadd.f32 %v797, %v892
          %v894 = vpop.f32.mrb[0].mxu0
          %895 = vmatprep.mubr.bf16.mxu0 0
          %896 = vmatmul.mubr.bf16.gmra.mrb[0].mxu0 %v770
          %v897 = vpop.f32.mrb[0].mxu0
          %v898 = vadd.f32 %v797, %v897
          %v899 = vpop.f32.mrb[0].mxu0
          %v900 = vpop.f32.mrb[0].mxu0
          %v901 = vadd.f32 %v797, %v900
          %v902 = vpop.f32.mrb[0].mxu0
          %903 = vmatprep.mubr.bf16.mxu0 0
          %904 = vmatmul.mubr.bf16.gmra.mrb[0].mxu0 %v771
          %v905 = vpop.f32.mrb[0].mxu0
          %v906 = vadd.f32 %v797, %v905
          %v907 = vpop.f32.mrb[0].mxu0
          %v908 = vpop.f32.mrb[0].mxu0
          %v909 = vadd.f32 %v797, %v908
          %v910 = vpop.f32.mrb[0].mxu0
          %911 = vmatprep.mubr.bf16.mxu0 0
          %912 = vmatmul.mubr.bf16.gmra.mrb[0].mxu0 %v772
          %v913 = vpop.f32.mrb[0].mxu0
          %v914 = vadd.f32 %v797, %v913
          %v915 = vpop.f32.mrb[0].mxu0
          %v916 = vpop.f32.mrb[0].mxu0
          %v917 = vadd.f32 %v797, %v916
          %v918 = vpop.f32.mrb[0].mxu0
          %919 = vmatprep.mubr.bf16.mxu0 0
          %920 = vmatmul.mubr.bf16.gmra.mrb[0].mxu0 %v773
          %v921 = vpop.f32.mrb[0].mxu0
          %v922 = vadd.f32 %v797, %v921
          %v923 = vpop.f32.mrb[0].mxu0
          %v924 = vpop.f32.mrb[0].mxu0
          %v925 = vadd.f32 %v797, %v924
          %v926 = vpop.f32.mrb[0].mxu0
          %927 = vmatprep.mubr.bf16.mxu0 0
          %928 = vmatmul.mubr.bf16.gmra.mrb[0].mxu0 %v774
          %v929 = vpop.f32.mrb[0].mxu0
          %v930 = vadd.f32 %v797, %v929
          %v931 = vpop.f32.mrb[0].mxu0
          %v932 = vpop.f32.mrb[0].mxu0
          %v933 = vadd.f32 %v797, %v932
          %v934 = vpop.f32.mrb[0].mxu0
          %935 = vmatprep.mubr.bf16.mxu0 0
          %936 = vmatmul.mubr.bf16.gmra.mrb[0].mxu0 %v775
          %v937 = vpop.f32.mrb[0].mxu0
          %v938 = vadd.f32 %v797, %v937
          %v939 = vpop.f32.mrb[0].mxu0
          %v940 = vpop.f32.mrb[0].mxu0
          %v941 = vadd.f32 %v797, %v940
          %v942 = vpop.f32.mrb[0].mxu0
          %943 = vdwg.mxu0
          %v944 = vmax.f32 %v882, 0.0
          %v945 = vmax.f32 %v885, 0.0
          %v946 = vmax.f32 %v890, 0.0
          %v947 = vmax.f32 %v893, 0.0
          %v948 = vmax.f32 %v898, 0.0
          %v949 = vmax.f32 %v901, 0.0
          %v950 = vmax.f32 %v906, 0.0
          %v951 = vmax.f32 %v909, 0.0
          %v952 = vmax.f32 %v914, 0.0
          %v953 = vmax.f32 %v917, 0.0
          %v954 = vmax.f32 %v922, 0.0
          %v955 = vmax.f32 %v925, 0.0
          %v956 = vmax.f32 %v930, 0.0
          %v957 = vmax.f32 %v933, 0.0
          %v958 = vmax.f32 %v938, 0.0
          %v959 = vmax.f32 %v941, 0.0
          %v960 = vld [vmem:[#allocation3] sm:$0xff]
          %v961 = vld [vmem:[%s447] sm:$0xf]
          %v962 = vpack.c.bf16 %v945, %v944
          %v963 = vpack.c.bf16 %v947, %v946
          %v964 = vpack.c.bf16 %v949, %v948
          %v965 = vpack.c.bf16 %v951, %v950
          %v966 = vpack.c.bf16 %v953, %v952
          %v967 = vpack.c.bf16 %v955, %v954
          %v968 = vpack.c.bf16 %v957, %v956
          %v969 = vpack.c.bf16 %v959, %v958
          %970 = vmatprep.subr.bf16.mxu0 0
          %971 = vmatpush1.bf16.msra.mxu0 %v962
          %972 = vmatprep.subr.bf16.mxu0 0
          %973 = vmatpush1.bf16.msra.mxu0 %v963
          %974 = vmatprep.subr.bf16.mxu0 0
          %975 = vmatpush1.bf16.msra.mxu0 %v964
          %976 = vmatprep.subr.bf16.mxu0 0
          %977 = vmatpush1.bf16.msra.mxu0 %v965
          %978 = vmatprep.subr.bf16.mxu0 0
          %979 = vmatpush1.bf16.msra.mxu0 %v966
          %980 = vmatprep.subr.bf16.mxu0 0
          %981 = vmatpush1.bf16.msra.mxu0 %v967
          %982 = vmatprep.subr.bf16.mxu0 0
          %983 = vmatpush1.bf16.msra.mxu0 %v968
          %984 = vmatprep.subr.bf16.mxu0 0
          %985 = vmatpush1.bf16.msra.mxu0 %v969
          %986 = vmatprep.subr.bf16.mxu0 0
          %987 = vmatpush1.bf16.msra.mxu0 0
          %988 = vmatprep.subr.bf16.mxu0 0
          %989 = vmatpush1.bf16.msra.mxu0 0
          %990 = vmatprep.subr.bf16.mxu0 0
          %991 = vmatpush1.bf16.msra.mxu0 0
          %992 = vmatprep.subr.bf16.mxu0 0
          %993 = vmatpush1.bf16.msra.mxu0 0
          %994 = vmatprep.subr.bf16.mxu0 0
          %995 = vmatpush1.bf16.msra.mxu0 0
          %996 = vmatprep.subr.bf16.mxu0 0
          %997 = vmatpush1.bf16.msra.mxu0 0
          %998 = vmatprep.subr.bf16.mxu0 0
          %999 = vmatpush1.bf16.msra.mxu0 0
          %1000 = vmatprep.subr.bf16.mxu0 0
          %1001 = vmatpush1.bf16.msra.mxu0 0
          %1002 = vmatprep.mubr.bf16.mxu0 0
          %1003 = vmatmul.mubr.bf16.gmra.mrb[0].mxu0 %v961
          %v1004 = vpop.f32.mrb[0].mxu0
          %v1005 = vadd.f32 0.0, %v1004
          %v1006 = vpop.f32.mrb[0].mxu0
          %v1007 = vpop.f32.mrb[0].mxu0
          %v1008 = vpop.f32.mrb[0].mxu0
          %1009 = vdwg.mxu0
          %v1010 = vadd.f32 %v960, %v1005
          %1011 = vst [vmem:[#allocation3] sm:$0xff] %v1010
        $region101: #{gnn_forward.3} parent=84 // pred_fallthru
          _
        %p1012 = scmp.eq.s32.totalorder %s25, 1
        %p1013 = pnand %p1012, %p748
        %p1014 = pneg %p1013
        // Predicated region
        $region102: #{gnn_forward.3} parent=84 // pred_check
          _
        $region103: #{gnn_forward.3} parent=84 // pred_check_branch
          %1016 = sbr.rel (%p1013) target = $region105
        $region104: #{gnn_forward.3} parent=84 // pred_region
          %v1017 = vld [vmem:[#allocation3] sm:$0xff]
          %v1018 = vpack.c.bf16 %v1017, %v1017
          %v1019 = vld [vmem:[%s5] sm:$0xf]
          %v1020 = vld [vmem:[%s5 + $0x4] sm:$0xf]
          %v1021 = vld [vmem:[%s5 + $0x8] sm:$0xf]
          %v1022 = vld [vmem:[%s5 + $0xc] sm:$0xf]
          %v1023 = vld [vmem:[%s5 + $0x10] sm:$0xf]
          %v1024 = vld [vmem:[%s5 + $0x14] sm:$0xf]
          %v1025 = vld [vmem:[%s5 + $0x18] sm:$0xf]
          %v1026 = vld [vmem:[%s5 + $0x1c] sm:$0xf]
          %v1027 = vld [vmem:[%s5 + $0x20] sm:$0xf]
          %v1028 = vld [vmem:[%s5 + $0x24] sm:$0xf]
          %v1029 = vld [vmem:[%s5 + $0x28] sm:$0xf]
          %v1030 = vld [vmem:[%s5 + $0x2c] sm:$0xf]
          %v1031 = vld [vmem:[%s5 + $0x30] sm:$0xf]
          %v1032 = vld [vmem:[%s5 + $0x34] sm:$0xf]
          %v1033 = vld [vmem:[%s5 + $0x38] sm:$0xf]
          %v1034 = vld [vmem:[%s5 + $0x3c] sm:$0xf]
          %v1035 = vld [vmem:[%s6] sm:$0x1]
          %v1037 = vlaneseq
          %v1038 = vshrl.u32 %v1037, 7
          %v1039 = vsub.s32 0, %v1038
          %v1040 = vrot.slane %v1035, %v1039
          %v1058 = vunpack.c.l.b16 %v1019
          %v1059 = vunpack.c.l.b16 %v1020
          %v1060 = vunpack.c.l.b16 %v1021
          %v1061 = vunpack.c.l.b16 %v1022
          %v1062 = vunpack.c.l.b16 %v1023
          %v1063 = vunpack.c.l.b16 %v1024
          %v1064 = vunpack.c.l.b16 %v1025
          %v1065 = vunpack.c.l.b16 %v1026
          %v1066 = vunpack.c.l.b16 %v1027
          %v1067 = vunpack.c.l.b16 %v1028
          %v1068 = vunpack.c.l.b16 %v1029
          %v1069 = vunpack.c.l.b16 %v1030
          %v1070 = vunpack.c.l.b16 %v1031
          %v1071 = vunpack.c.l.b16 %v1032
          %v1072 = vunpack.c.l.b16 %v1033
          %v1073 = vunpack.c.l.b16 %v1034
          %v1074 = vpack.c.b16 %v1059, %v1058
          %v1075 = vpack.c.b16 %v1061, %v1060
          %v1076 = vpack.c.b16 %v1063, %v1062
          %v1077 = vpack.c.b16 %v1065, %v1064
          %v1078 = vpack.c.b16 %v1067, %v1066
          %v1079 = vpack.c.b16 %v1069, %v1068
          %v1080 = vpack.c.b16 %v1071, %v1070
          %v1081 = vpack.c.b16 %v1073, %v1072
          %1090 = vmatprep.subr.bf16.mxu0 0
          %1091 = vmatpush1.bf16.msra.mxu0 %v1074
          %1092 = vmatprep.subr.bf16.mxu0 0
          %1093 = vmatpush1.bf16.msra.mxu0 %v1075
          %1094 = vmatprep.subr.bf16.mxu0 0
          %1095 = vmatpush1.bf16.msra.mxu0 %v1076
          %1096 = vmatprep.subr.bf16.mxu0 0
          %1097 = vmatpush1.bf16.msra.mxu0 %v1077
          %1098 = vmatprep.subr.bf16.mxu0 0
          %1099 = vmatpush1.bf16.msra.mxu0 %v1078
          %1100 = vmatprep.subr.bf16.mxu0 0
          %1101 = vmatpush1.bf16.msra.mxu0 %v1079
          %1102 = vmatprep.subr.bf16.mxu0 0
          %1103 = vmatpush1.bf16.msra.mxu0 %v1080
          %1104 = vmatprep.subr.bf16.mxu0 0
          %1105 = vmatpush1.bf16.msra.mxu0 %v1081
          %1106 = vmatprep.subr.bf16.mxu0 0
          %1107 = vmatpush1.bf16.msra.mxu0 0
          %1108 = vmatprep.subr.bf16.mxu0 0
          %1109 = vmatpush1.bf16.msra.mxu0 0
          %1110 = vmatprep.subr.bf16.mxu0 0
          %1111 = vmatpush1.bf16.msra.mxu0 0
          %1112 = vmatprep.subr.bf16.mxu0 0
          %1113 = vmatpush1.bf16.msra.mxu0 0
          %1114 = vmatprep.subr.bf16.mxu0 0
          %1115 = vmatpush1.bf16.msra.mxu0 0
          %1116 = vmatprep.subr.bf16.mxu0 0
          %1117 = vmatpush1.bf16.msra.mxu0 0
          %1118 = vmatprep.subr.bf16.mxu0 0
          %1119 = vmatpush1.bf16.msra.mxu0 0
          %1120 = vmatprep.subr.bf16.mxu0 0
          %1121 = vmatpush1.bf16.msra.mxu0 0
          %1122 = vmatprep.mubr.bf16.mxu0 0
          %1123 = vmatmul.mubr.bf16.gmra.mrb[0].mxu0 %v1018
          %v1124 = vpop.f32.mrb[0].mxu0
          %v1125 = vadd.f32 %v1040, %v1124
          %v1126 = vpop.f32.mrb[0].mxu0
          %v1127 = vpop.f32.mrb[0].mxu0
          %v1128 = vpop.f32.mrb[0].mxu0
          %1129 = vdwg.mxu0
          %1130 = vst [vmem:[#allocation5] sm:$0xff] %v1017
          %1131 = vst [vmem:[%s7] sm:$0xff] %v1125
        $region105: #{gnn_forward.3} parent=84 // pred_fallthru
          _
        // Predicated region
        $region106: #{gnn_forward.3} parent=84 // pred_check
          %p1132 = pneg %p210
        $region107: #{gnn_forward.3} parent=84 // pred_check_branch
          %1134 = sbr.rel (%p1132) target = $region109
        $region108: #{gnn_forward.3} parent=84 // pred_region
          _
        $region109: #{gnn_forward.3} parent=84 // pred_fallthru
          _
        // Predicated region
        $region110: #{gnn_forward.3} parent=84 // pred_check
          %p1135 = pneg %p231
        $region111: #{gnn_forward.3} parent=84 // pred_check_branch
          %1137 = sbr.rel (%p1135) target = $region113
        $region112: #{gnn_forward.3} parent=84 // pred_region
          %s1139 = ssub.s32 128, 128
          %1140 = vsyncadd [#allocation6], %s1139
          %s1142 = sshll.u32 [#allocation5], 4
          %s1143 = int_to_ptr.vmem [resolvable:$true] %s1142
          %1145 = dma.vmem_to_hbm [thread:$0]  %s1143, 128, %s8, [#allocation6]
        $region113: #{gnn_forward.3} parent=84 // pred_fallthru
          _
        // Predicated region
        $region114: #{gnn_forward.3} parent=84 // pred_check
          %p1146 = pneg %p210
        $region115: #{gnn_forward.3} parent=84 // pred_check_branch
          %1148 = sbr.rel (%p1146) target = $region117
        $region116: #{gnn_forward.3} parent=84 // pred_region
          _
        $region117: #{gnn_forward.3} parent=84 // pred_fallthru
          _
        // Predicated region
        $region118: #{gnn_forward.3} parent=84 // pred_check
          %p1149 = pneg %p231
        $region119: #{gnn_forward.3} parent=84 // pred_check_branch
          %1151 = sbr.rel (%p1149) target = $region121
        $region120: #{gnn_forward.3} parent=84 // pred_region
          %1152 = dma.done [#allocation6], 128
        $region121: #{gnn_forward.3} parent=84 // pred_fallthru
          _
      $region85: #{gnn_forward.3} parent=5 // pred_fallthru
        _
      %p1153 = scmp.le.s32.totalorder 2, %s16
      // Predicated region
      $region122: #{gnn_forward.3} parent=5 // pred_check
        %p1154 = pneg %p1153
      $region123: #{gnn_forward.3} parent=5 // pred_check_branch
        %1156 = sbr.rel (%p1154) target = $region125
      $region124: #{gnn_forward.3} parent=5 // pred_region
        %s1157 = ssub.s32 %s16, 2
      $region125: #{gnn_forward.3} parent=5 // pred_fallthru
        _
    $region6: #{gnn_forward.3} parent=1 // loop_footer
      %s20 = sadd.s32 1, %s16
    $region7: #{gnn_forward.3} parent=1 // loop_footer_branch
      %15 = sbr.rel target = $region3
    $region8: #{gnn_forward.3} parent=1 // loop_exit
      _
    %1158 = vsyncpa [#allocation6], 1
    %s1159 = scalar_lea.sflag [#allocation6], 1
    %1160 = vsyncpa %s1159, 1

// kernel: gnn_forward.2
$region0: #{gnn_forward.2}
  #allocation0 [shape = 'u32[]', space=smem, size = 0x4, offset = 0x4, fixed_abs, tag = 'smem constant byte address 0x4 - core index']
  #allocation1 [shape = 'u32[144,128]{1,0:T(1,128)}', space=vmem, size = 0x12000, scoped, tag = 'internal scratch']
  #allocation2 [shape = 'f32[128,16]{1,0:T(8,128)}', space=vmem, size = 0x10000, scoped, tag = 'scratch operand']
  %s0 = inlined_call_operand.vmem [shape: bf16[256,256], index: 0, kind: input, shape index: {}]
  %s1 = inlined_call_operand.vmem [shape: bf16[256,16], index: 1, kind: input, shape index: {}]
  %s2 = inlined_call_operand.vmem [shape: bf16[16,128], index: 2, kind: input, shape index: {}]
  %s3 = inlined_call_operand.vmem [shape: f32[1,128], index: 3, kind: input, shape index: {}]
  %s4 = inlined_call_operand.vmem [shape: bf16[256,128], index: 4, kind: output, shape index: {}]
  %s5 = sld [smem:[#allocation0]]
  $region98: #{gnn_forward.2} parent=0
    _
  %s7 = ssub.s32 1, %s5
  %s8 = scalar_select 0, %s7, %s5
  $region1: #{gnn_forward.2} parent=0
    #allocation3 [shape = 'u8[65536]{0}', space=vmem, size = 0x10000, scoped, tag = 'input window, operand 0']
    loop: start=0, step=1, limit=6
    $region2: #{gnn_forward.2} parent=1 // loop_pre_header
      _
    $region3: #{gnn_forward.2} parent=1 // loop_header
      %s10 = sphi 0, %s14
      %p11 = scmp.ge.s32.totalorder %s10, 6
      %s17 = sphi 0, %s29
      %s18 = sphi 0, %s25
      %s19 = sphi 0, %s17
      %s20 = sphi 0, %s18
      %s21 = sphi 0, %s19
      %s22 = sphi 0, %s20
      %s34 = sphi 0, %s36
      %s37 = sphi 0, %s34
      %s38 = sphi 0, %s37
      %s54 = sphi 0, %s38
      %s60 = sphi 0, %s62
      %s63 = sphi 0, %s60
      %s64 = sphi 0, %s63
      %s80 = sphi 0, %s64
      %s84 = sphi 0, %s84
      %s86 = sphi 0, %s84
      %s87 = sphi 0, %s86
      %s101 = sphi 0, %s87
      %s105 = sphi 0, %s105
      %s107 = sphi 0, %s105
      %s108 = sphi 0, %s107
      %s122 = sphi 0, %s108
      %s128 = sphi 0, %s130
      %s131 = sphi 0, %s128
      %s132 = sphi 0, %s131
      %s148 = sphi 0, %s132
    $region4: #{gnn_forward.2} parent=1 // loop_header_branch
      %13 = sbr.rel (%p11) target = $region8
    $region5: #{gnn_forward.2} parent=1 // loop_body
      %s15 = ssub.s32 %s10, 1
      %s16 = ssub.s32 %s10, 2
      %s23 = sadd.s32 1, %s18
      %p24 = scmp.ge.s32.totalorder %s23, 2
      %s25 = scalar_select %p24, 0, %s23
      %s26 = sadd.s32 1, %s17
      %s27 = scalar_select %p24, %s26, %s17
      %p28 = scmp.ge.s32.totalorder %s27, 2
      %s29 = scalar_select %p28, 0, %s27
      %s30 = ssub.s32 %s17, %s29
      %s31 = ssub.s32 %s18, %s25
      %s32 = sor.u32 %s30, %s31
      %p33 = scmp.eq.s32.totalorder %s32, 0
      %s35 = sadd.s32 %s34, 1
      %s36 = scalar_select %p33, %s34, %s35
      %p39 = pneg %p33
      %p40 = scmp.eq.s32.totalorder %s10, 3
      %p41 = por %p39, %p40
      %p42 = scmp.ne.s32.totalorder %s34, %s37
      %p43 = scmp.eq.s32.totalorder %s10, 0
      %p44 = por %p42, %p43
      %p45 = scmp.ne.s32.totalorder %s34, %s37
      %p46 = scmp.eq.s32.totalorder %s15, 3
      %p47 = por %p45, %p46
      %p48 = scmp.ne.s32.totalorder %s37, %s38
      %p49 = scmp.eq.s32.totalorder %s15, 0
      %p50 = por %p48, %p49
      %p51 = scmp.ne.s32.totalorder %s37, %s38
      %p52 = scmp.eq.s32.totalorder %s16, 3
      %p53 = por %p51, %p52
      %p55 = scmp.ne.s32.totalorder %s38, %s54
      %p56 = scmp.eq.s32.totalorder %s16, 0
      %p57 = por %p55, %p56
      %s58 = ssub.s32 %s18, %s25
      %p59 = scmp.eq.s32.totalorder %s58, 0
      %s61 = sadd.s32 %s60, 1
      %s62 = scalar_select %p59, %s60, %s61
      %p65 = pneg %p59
      %p66 = scmp.eq.s32.totalorder %s10, 3
      %p67 = por %p65, %p66
      %p68 = scmp.ne.s32.totalorder %s60, %s63
      %p69 = scmp.eq.s32.totalorder %s10, 0
      %p70 = por %p68, %p69
      %p71 = scmp.ne.s32.totalorder %s60, %s63
      %p72 = scmp.eq.s32.totalorder %s15, 3
      %p73 = por %p71, %p72
      %p74 = scmp.ne.s32.totalorder %s63, %s64
      %p75 = scmp.eq.s32.totalorder %s15, 0
      %p76 = por %p74, %p75
      %p77 = scmp.ne.s32.totalorder %s63, %s64
      %p78 = scmp.eq.s32.totalorder %s16, 3
      %p79 = por %p77, %p78
      %p81 = scmp.ne.s32.totalorder %s64, %s80
      %p82 = scmp.eq.s32.totalorder %s16, 0
      %p83 = por %p81, %p82
      %s85 = sadd.s32 %s84, 1
      %p88 = scmp.eq.s32.totalorder %s10, 3
      %p89 = scmp.ne.s32.totalorder %s84, %s86
      %p90 = scmp.eq.s32.totalorder %s10, 0
      %p91 = por %p89, %p90
      %p92 = scmp.ne.s32.totalorder %s84, %s86
      %p93 = scmp.eq.s32.totalorder %s15, 3
      %p94 = por %p92, %p93
      %p95 = scmp.ne.s32.totalorder %s86, %s87
      %p96 = scmp.eq.s32.totalorder %s15, 0
      %p97 = por %p95, %p96
      %p98 = scmp.ne.s32.totalorder %s86, %s87
      %p99 = scmp.eq.s32.totalorder %s16, 3
      %p100 = por %p98, %p99
      %p102 = scmp.ne.s32.totalorder %s87, %s101
      %p103 = scmp.eq.s32.totalorder %s16, 0
      %p104 = por %p102, %p103
      %s106 = sadd.s32 %s105, 1
      %p109 = scmp.eq.s32.totalorder %s10, 3
      %p110 = scmp.ne.s32.totalorder %s105, %s107
      %p111 = scmp.eq.s32.totalorder %s10, 0
      %p112 = por %p110, %p111
      %p113 = scmp.ne.s32.totalorder %s105, %s107
      %p114 = scmp.eq.s32.totalorder %s15, 3
      %p115 = por %p113, %p114
      %p116 = scmp.ne.s32.totalorder %s107, %s108
      %p117 = scmp.eq.s32.totalorder %s15, 0
      %p118 = por %p116, %p117
      %p119 = scmp.ne.s32.totalorder %s107, %s108
      %p120 = scmp.eq.s32.totalorder %s16, 3
      %p121 = por %p119, %p120
      %p123 = scmp.ne.s32.totalorder %s108, %s122
      %p124 = scmp.eq.s32.totalorder %s16, 0
      %p125 = por %p123, %p124
      %s126 = ssub.s32 %s17, %s29
      %p127 = scmp.eq.s32.totalorder %s126, 0
      %s129 = sadd.s32 %s128, 1
      %s130 = scalar_select %p127, %s128, %s129
      %p133 = pneg %p127
      %p134 = scmp.eq.s32.totalorder %s10, 3
      %p135 = por %p133, %p134
      %p136 = scmp.ne.s32.totalorder %s128, %s131
      %p137 = scmp.eq.s32.totalorder %s10, 0
      %p138 = por %p136, %p137
      %p139 = scmp.ne.s32.totalorder %s128, %s131
      %p140 = scmp.eq.s32.totalorder %s15, 3
      %p141 = por %p139, %p140
      %p142 = scmp.ne.s32.totalorder %s131, %s132
      %p143 = scmp.eq.s32.totalorder %s15, 0
      %p144 = por %p142, %p143
      %p145 = scmp.ne.s32.totalorder %s131, %s132
      %p146 = scmp.eq.s32.totalorder %s16, 3
      %p147 = por %p145, %p146
      %p149 = scmp.ne.s32.totalorder %s132, %s148
      %p150 = scmp.eq.s32.totalorder %s16, 0
      %p151 = por %p149, %p150
      %p152 = scmp.le.s32.totalorder 1, %s10
      %p153 = scmp.lt.s32.totalorder %s10, 5
      %p154 = pnand %p152, %p153
      %p155 = pneg %p154
      // Predicated region
      $region9: #{gnn_forward.2} parent=5 // pred_check
        _
      $region10: #{gnn_forward.2} parent=5 // pred_check_branch
        %157 = sbr.rel (%p154) target = $region12
      $region11: #{gnn_forward.2} parent=5 // pred_region
        %s158 = ssub.s32 %s10, 1
        // Predicated region
        $region13: #{gnn_forward.2} parent=11 // pred_check
          %p159 = pneg %p97
        $region14: #{gnn_forward.2} parent=11 // pred_check_branch
          %161 = sbr.rel (%p159) target = $region16
        $region15: #{gnn_forward.2} parent=11 // pred_region
          _
        $region16: #{gnn_forward.2} parent=11 // pred_fallthru
          _
        // Predicated region
        $region17: #{gnn_forward.2} parent=11 // pred_check
          %p162 = pneg %p118
        $region18: #{gnn_forward.2} parent=11 // pred_check_branch
          %164 = sbr.rel (%p162) target = $region20
        $region19: #{gnn_forward.2} parent=11 // pred_region
          _
        $region20: #{gnn_forward.2} parent=11 // pred_fallthru
          _
      $region12: #{gnn_forward.2} parent=5 // pred_fallthru
        _
      %p165 = scmp.lt.s32.totalorder %s10, 4
      // Predicated region
      $region21: #{gnn_forward.2} parent=5 // pred_check
        %p166 = pneg %p165
      $region22: #{gnn_forward.2} parent=5 // pred_check_branch
        %168 = sbr.rel (%p166) target = $region24
      $region23: #{gnn_forward.2} parent=5 // pred_region
        // Predicated region
        $region25: #{gnn_forward.2} parent=23 // pred_check
          %p169 = pneg %p44
        $region26: #{gnn_forward.2} parent=23 // pred_check_branch
          %171 = sbr.rel (%p169) target = $region28
        $region27: #{gnn_forward.2} parent=23 // pred_region
          %s172 = sand.u32 %s34, 1
          %s173 = sand.u32 %s34, 1
          %s174 = smul.addr %s173, 64
          %s175 = scalar_lea.vmem [#allocation3], %s174
          %s176 = smul.u32 16, %s17
          %s177 = smul.addr %s176, 2
          %s178 = sadd.s32 %s18, %s177
          %s179 = smul.addr %s178, 4
          %s180 = scalar_lea.vmem %s0, %s179
          // Predicated region
          $region29: #{gnn_forward.2} parent=27 // pred_check
            _
          $region30: #{gnn_forward.2} parent=27 // pred_check_branch
            %182 = sbr.rel (0) target = $region32
          $region31: #{gnn_forward.2} parent=27 // pred_region
            // Predicated region
            $region33: #{gnn_forward.2} parent=31 // pred_check
              _
            $region34: #{gnn_forward.2} parent=31 // pred_check_branch
              %184 = sbr.rel target = $region36
            $region35: #{gnn_forward.2} parent=31 // pred_region
              // Predicated region
              $region48: #{gnn_forward.2} parent=35 // pred_check
                _
              $region49: #{gnn_forward.2} parent=35 // pred_check_branch
                %229 = sbr.rel (0) target = $region51
              $region50: #{gnn_forward.2} parent=35 // pred_region
                loop: start=0, step=1, limit=1
                $region52: #{gnn_forward.2} parent=50 // loop_pre_header
                  _
                $region53: #{gnn_forward.2} parent=50 // loop_header
                  %s231 = sphi 0, %s235
                  %p232 = scmp.ge.s32.totalorder %s231, 1
                  %s236 = sphi %s180, %s180
                  %s237 = sphi %s175, %s175
                $region54: #{gnn_forward.2} parent=50 // loop_header_branch
                  %234 = sbr.rel (%p232) target = $region58
                $region55: #{gnn_forward.2} parent=50 // loop_body
                  _
                $region56: #{gnn_forward.2} parent=50 // loop_footer
                  %s235 = sadd.s32 1, %s231
                $region57: #{gnn_forward.2} parent=50 // loop_footer_branch
                  %230 = sbr.rel target = $region53
                $region58: #{gnn_forward.2} parent=50 // loop_exit
                  _
                loop: start=0, step=1, limit=1
                $region59: #{gnn_forward.2} parent=50 // loop_pre_header
                  _
                $region60: #{gnn_forward.2} parent=50 // loop_header
                  %s240 = sphi 0, %s244
                  %p241 = scmp.ge.s32.totalorder %s240, 1
                  %s245 = sphi %s180, %s180
                  %s246 = sphi %s175, %s175
                $region61: #{gnn_forward.2} parent=50 // loop_header_branch
                  %243 = sbr.rel (%p241) target = $region65
                $region62: #{gnn_forward.2} parent=50 // loop_body
                  %v247 = vld [vmem:[%s245] sm:$0xf]
                  %248 = vst [vmem:[%s246] sm:$0xf] %v247
                  %v249 = vld [vmem:[%s245 + $0x8] sm:$0xf]
                  %250 = vst [vmem:[%s246 + $0x4] sm:$0xf] %v249
                  %v251 = vld [vmem:[%s245 + $0x10] sm:$0xf]
                  %252 = vst [vmem:[%s246 + $0x8] sm:$0xf] %v251
                  %v253 = vld [vmem:[%s245 + $0x18] sm:$0xf]
                  %254 = vst [vmem:[%s246 + $0xc] sm:$0xf] %v253
                  %v255 = vld [vmem:[%s245 + $0x20] sm:$0xf]
                  %256 = vst [vmem:[%s246 + $0x10] sm:$0xf] %v255
                  %v257 = vld [vmem:[%s245 + $0x28] sm:$0xf]
                  %258 = vst [vmem:[%s246 + $0x14] sm:$0xf] %v257
                  %v259 = vld [vmem:[%s245 + $0x30] sm:$0xf]
                  %260 = vst [vmem:[%s246 + $0x18] sm:$0xf] %v259
                  %v261 = vld [vmem:[%s245 + $0x38] sm:$0xf]
                  %262 = vst [vmem:[%s246 + $0x1c] sm:$0xf] %v261
                  %v263 = vld [vmem:[%s245 + $0x40] sm:$0xf]
                  %264 = vst [vmem:[%s246 + $0x20] sm:$0xf] %v263
                  %v265 = vld [vmem:[%s245 + $0x48] sm:$0xf]
                  %266 = vst [vmem:[%s246 + $0x24] sm:$0xf] %v265
                  %v267 = vld [vmem:[%s245 + $0x50] sm:$0xf]
                  %268 = vst [vmem:[%s246 + $0x28] sm:$0xf] %v267
                  %v269 = vld [vmem:[%s245 + $0x58] sm:$0xf]
                  %270 = vst [vmem:[%s246 + $0x2c] sm:$0xf] %v269
                  %v271 = vld [vmem:[%s245 + $0x60] sm:$0xf]
                  %272 = vst [vmem:[%s246 + $0x30] sm:$0xf] %v271
                  %v273 = vld [vmem:[%s245 + $0x68] sm:$0xf]
                  %274 = vst [vmem:[%s246 + $0x34] sm:$0xf] %v273
                  %v275 = vld [vmem:[%s245 + $0x70] sm:$0xf]
                  %276 = vst [vmem:[%s246 + $0x38] sm:$0xf] %v275
                  %v277 = vld [vmem:[%s245 + $0x78] sm:$0xf]
                  %278 = vst [vmem:[%s246 + $0x3c] sm:$0xf] %v277
                $region63: #{gnn_forward.2} parent=50 // loop_footer
                  %s244 = sadd.s32 1, %s240
                $region64: #{gnn_forward.2} parent=50 // loop_footer_branch
                  %239 = sbr.rel target = $region60
                $region65: #{gnn_forward.2} parent=50 // loop_exit
                  _
              $region51: #{gnn_forward.2} parent=35 // pred_fallthru
                _
            $region36: #{gnn_forward.2} parent=31 // pred_fallthru
              _
            // Predicated region
            $region37: #{gnn_forward.2} parent=31 // pred_check
              _
            $region38: #{gnn_forward.2} parent=31 // pred_check_branch
              %186 = sbr.rel (0) target = $region40
            $region39: #{gnn_forward.2} parent=31 // pred_region
              loop: start=0, step=1, limit=1
              $region41: #{gnn_forward.2} parent=39 // loop_pre_header
                _
              $region42: #{gnn_forward.2} parent=39 // loop_header
                %s189 = sphi 0, %s193
                %p190 = scmp.ge.s32.totalorder %s189, 1
                %s194 = sphi %s180, %s180
                %s195 = sphi %s175, %s175
              $region43: #{gnn_forward.2} parent=39 // loop_header_branch
                %192 = sbr.rel (%p190) target = $region47
              $region44: #{gnn_forward.2} parent=39 // loop_body
                %v196 = vld [vmem:[%s194] sm:$0xf]
                %197 = vst [vmem:[%s195] sm:$0xf] %v196
                %v198 = vld [vmem:[%s194 + $0x8] sm:$0xf]
                %199 = vst [vmem:[%s195 + $0x4] sm:$0xf] %v198
                %v200 = vld [vmem:[%s194 + $0x10] sm:$0xf]
                %201 = vst [vmem:[%s195 + $0x8] sm:$0xf] %v200
                %v202 = vld [vmem:[%s194 + $0x18] sm:$0xf]
                %203 = vst [vmem:[%s195 + $0xc] sm:$0xf] %v202
                %v204 = vld [vmem:[%s194 + $0x20] sm:$0xf]
                %205 = vst [vmem:[%s195 + $0x10] sm:$0xf] %v204
                %v206 = vld [vmem:[%s194 + $0x28] sm:$0xf]
                %207 = vst [vmem:[%s195 + $0x14] sm:$0xf] %v206
                %v208 = vld [vmem:[%s194 + $0x30] sm:$0xf]
                %209 = vst [vmem:[%s195 + $0x18] sm:$0xf] %v208
                %v210 = vld [vmem:[%s194 + $0x38] sm:$0xf]
                %211 = vst [vmem:[%s195 + $0x1c] sm:$0xf] %v210
                %v212 = vld [vmem:[%s194 + $0x40] sm:$0xf]
                %213 = vst [vmem:[%s195 + $0x20] sm:$0xf] %v212
                %v214 = vld [vmem:[%s194 + $0x48] sm:$0xf]
                %215 = vst [vmem:[%s195 + $0x24] sm:$0xf] %v214
                %v216 = vld [vmem:[%s194 + $0x50] sm:$0xf]
                %217 = vst [vmem:[%s195 + $0x28] sm:$0xf] %v216
                %v218 = vld [vmem:[%s194 + $0x58] sm:$0xf]
                %219 = vst [vmem:[%s195 + $0x2c] sm:$0xf] %v218
                %v220 = vld [vmem:[%s194 + $0x60] sm:$0xf]
                %221 = vst [vmem:[%s195 + $0x30] sm:$0xf] %v220
                %v222 = vld [vmem:[%s194 + $0x68] sm:$0xf]
                %223 = vst [vmem:[%s195 + $0x34] sm:$0xf] %v222
                %v224 = vld [vmem:[%s194 + $0x70] sm:$0xf]
                %225 = vst [vmem:[%s195 + $0x38] sm:$0xf] %v224
                %v226 = vld [vmem:[%s194 + $0x78] sm:$0xf]
                %227 = vst [vmem:[%s195 + $0x3c] sm:$0xf] %v226
              $region45: #{gnn_forward.2} parent=39 // loop_footer
                %s193 = sadd.s32 1, %s189
              $region46: #{gnn_forward.2} parent=39 // loop_footer_branch
                %188 = sbr.rel target = $region42
              $region47: #{gnn_forward.2} parent=39 // loop_exit
                _
            $region40: #{gnn_forward.2} parent=31 // pred_fallthru
              _
          $region32: #{gnn_forward.2} parent=27 // pred_fallthru
            _
          %279 = vnop
        $region28: #{gnn_forward.2} parent=23 // pred_fallthru
          _
        // Predicated region
        $region66: #{gnn_forward.2} parent=23 // pred_check
          %p280 = pneg %p70
        $region67: #{gnn_forward.2} parent=23 // pred_check_branch
          %282 = sbr.rel (%p280) target = $region69
        $region68: #{gnn_forward.2} parent=23 // pred_region
          %s283 = smul.u32 16, %s18
          %p284 = scmp.lt.s32.totalorder %s283, 31
          %s285 = scalar_select %p284, %s283, 31
          %s286 = smul.addr %s285, 4
          %s287 = scalar_lea.vmem %s1, %s286
          %s288 = smul.u32 16, %s18
        $region69: #{gnn_forward.2} parent=23 // pred_fallthru
          _
      $region24: #{gnn_forward.2} parent=5 // pred_fallthru
        _
      %p289 = scmp.le.s32.totalorder 1, %s10
      %p290 = scmp.lt.s32.totalorder %s10, 5
      %p291 = pnand %p289, %p290
      %p292 = pneg %p291
      // Predicated region
      $region70: #{gnn_forward.2} parent=5 // pred_check
        _
      $region71: #{gnn_forward.2} parent=5 // pred_check_branch
        %294 = sbr.rel (%p291) target = $region73
      $region72: #{gnn_forward.2} parent=5 // pred_region
        %s295 = ssub.s32 %s10, 1
        %s296 = sand.u32 %s37, 1
        %s297 = sand.u32 %s37, 1
        %s298 = smul.addr %s297, 64
        %s299 = scalar_lea.vmem [#allocation3], %s298
        // Predicated region
        $region74: #{gnn_forward.2} parent=72 // pred_check
          %p300 = pneg %p50
        $region75: #{gnn_forward.2} parent=72 // pred_check_branch
          %302 = sbr.rel (%p300) target = $region77
        $region76: #{gnn_forward.2} parent=72 // pred_region
          _
        $region77: #{gnn_forward.2} parent=72 // pred_fallthru
          _
        %s303 = sand.u32 %s37, 1
        %s304 = sand.u32 %s37, 1
        %s305 = smul.addr %s304, 64
        %s306 = scalar_lea.vmem [#allocation3], %s305
        %p307 = pneg %p50
        %p308 = pneg %p47
        %s309 = smul.u32 16, %s20
        %p310 = scmp.lt.s32.totalorder %s309, 31
        %s311 = scalar_select %p310, %s309, 31
        %s312 = smul.addr %s311, 4
        %s313 = scalar_lea.vmem %s1, %s312
        %p314 = pneg %p76
        %p315 = pneg %p73
        %p316 = pneg %p97
        %p317 = pneg %p94
        %p318 = pneg %p118
        %p319 = pneg %p115
        %p320 = pneg %p144
        %p321 = pneg %p141
        %s322 = smul.u32 16, %s19
        %p323 = scmp.lt.s32.totalorder %s322, 31
        %s324 = scalar_select %p323, %s322, 31
        %s325 = smul.addr %s324, 4
        %s326 = scalar_lea.vmem %s4, %s325
        %s327 = smul.u32 16, %s19
        %s328 = smul.u32 16, %s20
        %p329 = scmp.lt.s32.totalorder %s328, 31
        %s330 = scalar_select %p329, %s328, 31
        %s331 = smul.addr %s330, 4
        %s332 = scalar_lea.vmem %s1, %s331
        %s333 = smul.u32 16, %s20
        %s334 = smul.u32 16, %s19
        %p335 = scmp.lt.s32.totalorder %s334, 31
        %s336 = scalar_select %p335, %s334, 31
        %s337 = smul.addr %s336, 4
        %s338 = scalar_lea.vmem %s4, %s337
        %s339 = smul.u32 16, %s19
        %p341 = scmp.eq.s32.totalorder %s20, 0
        // Predicated region
        $region78: #{gnn_forward.2} parent=72 // pred_check
          %p342 = pneg %p341
        $region79: #{gnn_forward.2} parent=72 // pred_check_branch
          %344 = sbr.rel (%p342) target = $region81
        $region80: #{gnn_forward.2} parent=72 // pred_region
          %vm345 = vcmask 130048
          %346 = vst.msk [vmem:[#allocation2] sm:$0xff] %vm345, 0.0
          %347 = vst.msk [vmem:[#allocation2 + $0x8] sm:$0xff] %vm345, 0.0
          %348 = vst.msk [vmem:[#allocation2 + $0x10] sm:$0xff] %vm345, 0.0
          %349 = vst.msk [vmem:[#allocation2 + $0x18] sm:$0xff] %vm345, 0.0
          %350 = vst.msk [vmem:[#allocation2 + $0x20] sm:$0xff] %vm345, 0.0
          %351 = vst.msk [vmem:[#allocation2 + $0x28] sm:$0xff] %vm345, 0.0
          %352 = vst.msk [vmem:[#allocation2 + $0x30] sm:$0xff] %vm345, 0.0
          %353 = vst.msk [vmem:[#allocation2 + $0x38] sm:$0xff] %vm345, 0.0
          %354 = vst.msk [vmem:[#allocation2 + $0x40] sm:$0xff] %vm345, 0.0
          %355 = vst.msk [vmem:[#allocation2 + $0x48] sm:$0xff] %vm345, 0.0
          %356 = vst.msk [vmem:[#allocation2 + $0x50] sm:$0xff] %vm345, 0.0
          %357 = vst.msk [vmem:[#allocation2 + $0x58] sm:$0xff] %vm345, 0.0
          %358 = vst.msk [vmem:[#allocation2 + $0x60] sm:$0xff] %vm345, 0.0
          %359 = vst.msk [vmem:[#allocation2 + $0x68] sm:$0xff] %vm345, 0.0
          %360 = vst.msk [vmem:[#allocation2 + $0x70] sm:$0xff] %vm345, 0.0
          %361 = vst.msk [vmem:[#allocation2 + $0x78] sm:$0xff] %vm345, 0.0
        $region81: #{gnn_forward.2} parent=72 // pred_fallthru
          _
        %v362 = vld [vmem:[#allocation2] sm:$0xff]
        %v363 = vld [vmem:[#allocation2 + $0x8] sm:$0xff]
        %v364 = vld [vmem:[#allocation2 + $0x10] sm:$0xff]
        %v365 = vld [vmem:[#allocation2 + $0x18] sm:$0xff]
        %v366 = vld [vmem:[#allocation2 + $0x20] sm:$0xff]
        %v367 = vld [vmem:[#allocation2 + $0x28] sm:$0xff]
        %v368 = vld [vmem:[#allocation2 + $0x30] sm:$0xff]
        %v369 = vld [vmem:[#allocation2 + $0x38] sm:$0xff]
        %v370 = vld [vmem:[#allocation2 + $0x40] sm:$0xff]
        %v371 = vld [vmem:[#allocation2 + $0x48] sm:$0xff]
        %v372 = vld [vmem:[#allocation2 + $0x50] sm:$0xff]
        %v373 = vld [vmem:[#allocation2 + $0x58] sm:$0xff]
        %v374 = vld [vmem:[#allocation2 + $0x60] sm:$0xff]
        %v375 = vld [vmem:[#allocation2 + $0x68] sm:$0xff]
        %v376 = vld [vmem:[#allocation2 + $0x70] sm:$0xff]
        %v377 = vld [vmem:[#allocation2 + $0x78] sm:$0xff]
        %v378 = vld [vmem:[%s299] sm:$0xf]
        %v379 = vld [vmem:[%s299 + $0x4] sm:$0xf]
        %v380 = vld [vmem:[%s299 + $0x8] sm:$0xf]
        %v381 = vld [vmem:[%s299 + $0xc] sm:$0xf]
        %v382 = vld [vmem:[%s299 + $0x10] sm:$0xf]
        %v383 = vld [vmem:[%s299 + $0x14] sm:$0xf]
        %v384 = vld [vmem:[%s299 + $0x18] sm:$0xf]
        %v385 = vld [vmem:[%s299 + $0x1c] sm:$0xf]
        %v386 = vld [vmem:[%s299 + $0x20] sm:$0xf]
        %v387 = vld [vmem:[%s299 + $0x24] sm:$0xf]
        %v388 = vld [vmem:[%s299 + $0x28] sm:$0xf]
        %v389 = vld [vmem:[%s299 + $0x2c] sm:$0xf]
        %v390 = vld [vmem:[%s299 + $0x30] sm:$0xf]
        %v391 = vld [vmem:[%s299 + $0x34] sm:$0xf]
        %v392 = vld [vmem:[%s299 + $0x38] sm:$0xf]
        %v393 = vld [vmem:[%s299 + $0x3c] sm:$0xf]
        %v394 = vld [vmem:[%s332] sm:$0xf]
        %v395 = vld [vmem:[%s332 + $0x4] sm:$0xf]
        %v396 = vld [vmem:[%s332 + $0x8] sm:$0xf]
        %v397 = vld [vmem:[%s332 + $0xc] sm:$0xf]
        %v398 = vld [vmem:[%s332 + $0x10] sm:$0xf]
        %v399 = vld [vmem:[%s332 + $0x14] sm:$0xf]
        %v400 = vld [vmem:[%s332 + $0x18] sm:$0xf]
        %v401 = vld [vmem:[%s332 + $0x1c] sm:$0xf]
        %v402 = vld [vmem:[%s332 + $0x20] sm:$0xf]
        %v403 = vld [vmem:[%s332 + $0x24] sm:$0xf]
        %v404 = vld [vmem:[%s332 + $0x28] sm:$0xf]
        %v405 = vld [vmem:[%s332 + $0x2c] sm:$0xf]
        %v406 = vld [vmem:[%s332 + $0x30] sm:$0xf]
        %v407 = vld [vmem:[%s332 + $0x34] sm:$0xf]
        %v408 = vld [vmem:[%s332 + $0x38] sm:$0xf]
        %v409 = vld [vmem:[%s332 + $0x3c] sm:$0xf]
        %v426 = vunpack.c.l.b16 %v378
        %v427 = vunpack.c.l.b16 %v379
        %v428 = vunpack.c.l.b16 %v380
        %v429 = vunpack.c.l.b16 %v381
        %v430 = vunpack.c.l.b16 %v382
        %v431 = vunpack.c.l.b16 %v383
        %v432 = vunpack.c.l.b16 %v384
        %v433 = vunpack.c.l.b16 %v385
        %v434 = vunpack.c.l.b16 %v386
        %v435 = vunpack.c.l.b16 %v387
        %v436 = vunpack.c.l.b16 %v388
        %v437 = vunpack.c.l.b16 %v389
        %v438 = vunpack.c.l.b16 %v390
        %v439 = vunpack.c.l.b16 %v391
        %v440 = vunpack.c.l.b16 %v392
        %v441 = vunpack.c.l.b16 %v393
        %v442 = vpack.c.b16 %v427, %v426
        %v443 = vpack.c.b16 %v429, %v428
        %v444 = vpack.c.b16 %v431, %v430
        %v445 = vpack.c.b16 %v433, %v432
        %v446 = vpack.c.b16 %v435, %v434
        %v447 = vpack.c.b16 %v437, %v436
        %v448 = vpack.c.b16 %v439, %v438
        %v449 = vpack.c.b16 %v441, %v440
        %v474 = vunpack.c.l.b16 %v394
        %v475 = vunpack.c.l.b16 %v395
        %v476 = vunpack.c.l.b16 %v396
        %v477 = vunpack.c.l.b16 %v397
        %v478 = vunpack.c.l.b16 %v398
        %v479 = vunpack.c.l.b16 %v399
        %v480 = vunpack.c.l.b16 %v400
        %v481 = vunpack.c.l.b16 %v401
        %v482 = vunpack.c.l.b16 %v402
        %v483 = vunpack.c.l.b16 %v403
        %v484 = vunpack.c.l.b16 %v404
        %v485 = vunpack.c.l.b16 %v405
        %v486 = vunpack.c.l.b16 %v406
        %v487 = vunpack.c.l.b16 %v407
        %v488 = vunpack.c.l.b16 %v408
        %v489 = vunpack.c.l.b16 %v409
        %v490 = vpack.c.b16 %v475, %v474
        %v491 = vpack.c.b16 %v477, %v476
        %v492 = vpack.c.b16 %v479, %v478
        %v493 = vpack.c.b16 %v481, %v480
        %v494 = vpack.c.b16 %v483, %v482
        %v495 = vpack.c.b16 %v485, %v484
        %v496 = vpack.c.b16 %v487, %v486
        %v497 = vpack.c.b16 %v489, %v488
        %506 = vmatprep.subr.bf16.mxu0 0
        %507 = vmatpush1.bf16.msra.mxu0 %v490
        %508 = vmatprep.subr.bf16.mxu0 0
        %509 = vmatpush1.bf16.msra.mxu0 %v491
        %510 = vmatprep.subr.bf16.mxu0 0
        %511 = vmatpush1.bf16.msra.mxu0 %v492
        %512 = vmatprep.subr.bf16.mxu0 0
        %513 = vmatpush1.bf16.msra.mxu0 %v493
        %514 = vmatprep.subr.bf16.mxu0 0
        %515 = vmatpush1.bf16.msra.mxu0 %v494
        %516 = vmatprep.subr.bf16.mxu0 0
        %517 = vmatpush1.bf16.msra.mxu0 %v495
        %518 = vmatprep.subr.bf16.mxu0 0
        %519 = vmatpush1.bf16.msra.mxu0 %v496
        %520 = vmatprep.subr.bf16.mxu0 0
        %521 = vmatpush1.bf16.msra.mxu0 %v497
        %522 = vmatprep.subr.bf16.mxu0 0
        %523 = vmatpush1.bf16.msra.mxu0 0
        %524 = vmatprep.subr.bf16.mxu0 0
        %525 = vmatpush1.bf16.msra.mxu0 0
        %526 = vmatprep.subr.bf16.mxu0 0
        %527 = vmatpush1.bf16.msra.mxu0 0
        %528 = vmatprep.subr.bf16.mxu0 0
        %529 = vmatpush1.bf16.msra.mxu0 0
        %530 = vmatprep.subr.bf16.mxu0 0
        %531 = vmatpush1.bf16.msra.mxu0 0
        %532 = vmatprep.subr.bf16.mxu0 0
        %533 = vmatpush1.bf16.msra.mxu0 0
        %534 = vmatprep.subr.bf16.mxu0 0
        %535 = vmatpush1.bf16.msra.mxu0 0
        %536 = vmatprep.subr.bf16.mxu0 0
        %537 = vmatpush1.bf16.msra.mxu0 0
        %538 = vmatprep.mubr.bf16.mxu0 0
        %539 = vmatmul.mubr.bf16.gmra.mrb[0].mxu0 %v442
        %v540 = vpop.f32.mrb[0].mxu0
        %v541 = vadd.f32 0.0, %v540
        %v542 = vpop.f32.mrb[0].mxu0
        %v543 = vpop.f32.mrb[0].mxu0
        %v544 = vadd.f32 0.0, %v543
        %v545 = vpop.f32.mrb[0].mxu0
        %546 = vmatprep.mubr.bf16.mxu0 0
        %547 = vmatmul.mubr.bf16.gmra.mrb[0].mxu0 %v443
        %v548 = vpop.f32.mrb[0].mxu0
        %v549 = vadd.f32 0.0, %v548
        %v550 = vpop.f32.mrb[0].mxu0
        %v551 = vpop.f32.mrb[0].mxu0
        %v552 = vadd.f32 0.0, %v551
        %v553 = vpop.f32.mrb[0].mxu0
        %554 = vmatprep.mubr.bf16.mxu0 0
        %555 = vmatmul.mubr.bf16.gmra.mrb[0].mxu0 %v444
        %v556 = vpop.f32.mrb[0].mxu0
        %v557 = vadd.f32 0.0, %v556
        %v558 = vpop.f32.mrb[0].mxu0
        %v559 = vpop.f32.mrb[0].mxu0
        %v560 = vadd.f32 0.0, %v559
        %v561 = vpop.f32.mrb[0].mxu0
        %562 = vmatprep.mubr.bf16.mxu0 0
        %563 = vmatmul.mubr.bf16.gmra.mrb[0].mxu0 %v445
        %v564 = vpop.f32.mrb[0].mxu0
        %v565 = vadd.f32 0.0, %v564
        %v566 = vpop.f32.mrb[0].mxu0
        %v567 = vpop.f32.mrb[0].mxu0
        %v568 = vadd.f32 0.0, %v567
        %v569 = vpop.f32.mrb[0].mxu0
        %570 = vmatprep.mubr.bf16.mxu0 0
        %571 = vmatmul.mubr.bf16.gmra.mrb[0].mxu0 %v446
        %v572 = vpop.f32.mrb[0].mxu0
        %v573 = vadd.f32 0.0, %v572
        %v574 = vpop.f32.mrb[0].mxu0
        %v575 = vpop.f32.mrb[0].mxu0
        %v576 = vadd.f32 0.0, %v575
        %v577 = vpop.f32.mrb[0].mxu0
        %578 = vmatprep.mubr.bf16.mxu0 0
        %579 = vmatmul.mubr.bf16.gmra.mrb[0].mxu0 %v447
        %v580 = vpop.f32.mrb[0].mxu0
        %v581 = vadd.f32 0.0, %v580
        %v582 = vpop.f32.mrb[0].mxu0
        %v583 = vpop.f32.mrb[0].mxu0
        %v584 = vadd.f32 0.0, %v583
        %v585 = vpop.f32.mrb[0].mxu0
        %586 = vmatprep.mubr.bf16.mxu0 0
        %587 = vmatmul.mubr.bf16.gmra.mrb[0].mxu0 %v448
        %v588 = vpop.f32.mrb[0].mxu0
        %v589 = vadd.f32 0.0, %v588
        %v590 = vpop.f32.mrb[0].mxu0
        %v591 = vpop.f32.mrb[0].mxu0
        %v592 = vadd.f32 0.0, %v591
        %v593 = vpop.f32.mrb[0].mxu0
        %594 = vmatprep.mubr.bf16.mxu0 0
        %595 = vmatmul.mubr.bf16.gmra.mrb[0].mxu0 %v449
        %v596 = vpop.f32.mrb[0].mxu0
        %v597 = vadd.f32 0.0, %v596
        %v598 = vpop.f32.mrb[0].mxu0
        %v599 = vpop.f32.mrb[0].mxu0
        %v600 = vadd.f32 0.0, %v599
        %v601 = vpop.f32.mrb[0].mxu0
        %602 = vdwg.mxu0
        %v603 = vadd.f32 %v362, %v541
        %v604 = vadd.f32 %v363, %v544
        %v605 = vadd.f32 %v364, %v549
        %v606 = vadd.f32 %v365, %v552
        %v607 = vadd.f32 %v366, %v557
        %v608 = vadd.f32 %v367, %v560
        %v609 = vadd.f32 %v368, %v565
        %v610 = vadd.f32 %v369, %v568
        %v611 = vadd.f32 %v370, %v573
        %v612 = vadd.f32 %v371, %v576
        %v613 = vadd.f32 %v372, %v581
        %v614 = vadd.f32 %v373, %v584
        %v615 = vadd.f32 %v374, %v589
        %v616 = vadd.f32 %v375, %v592
        %v617 = vadd.f32 %v376, %v597
        %v618 = vadd.f32 %v377, %v600
        %vm619 = vcmask 130048
        %620 = vst.msk [vmem:[#allocation2] sm:$0xff] %vm619, %v603
        %621 = vst.msk [vmem:[#allocation2 + $0x8] sm:$0xff] %vm619, %v604
        %622 = vst.msk [vmem:[#allocation2 + $0x10] sm:$0xff] %vm619, %v605
        %623 = vst.msk [vmem:[#allocation2 + $0x18] sm:$0xff] %vm619, %v606
        %624 = vst.msk [vmem:[#allocation2 + $0x20] sm:$0xff] %vm619, %v607
        %625 = vst.msk [vmem:[#allocation2 + $0x28] sm:$0xff] %vm619, %v608
        %626 = vst.msk [vmem:[#allocation2 + $0x30] sm:$0xff] %vm619, %v609
        %627 = vst.msk [vmem:[#allocation2 + $0x38] sm:$0xff] %vm619, %v610
        %628 = vst.msk [vmem:[#allocation2 + $0x40] sm:$0xff] %vm619, %v611
        %629 = vst.msk [vmem:[#allocation2 + $0x48] sm:$0xff] %vm619, %v612
        %630 = vst.msk [vmem:[#allocation2 + $0x50] sm:$0xff] %vm619, %v613
        %631 = vst.msk [vmem:[#allocation2 + $0x58] sm:$0xff] %vm619, %v614
        %632 = vst.msk [vmem:[#allocation2 + $0x60] sm:$0xff] %vm619, %v615
        %633 = vst.msk [vmem:[#allocation2 + $0x68] sm:$0xff] %vm619, %v616
        %634 = vst.msk [vmem:[#allocation2 + $0x70] sm:$0xff] %vm619, %v617
        %635 = vst.msk [vmem:[#allocation2 + $0x78] sm:$0xff] %vm619, %v618
        %p636 = scmp.eq.s32.totalorder %s20, 1
        // Predicated region
        $region82: #{gnn_forward.2} parent=72 // pred_check
          %p637 = pneg %p636
        $region83: #{gnn_forward.2} parent=72 // pred_check_branch
          %639 = sbr.rel (%p637) target = $region85
        $region84: #{gnn_forward.2} parent=72 // pred_region
          %v640 = vld [vmem:[#allocation2] sm:$0xff]
          %v641 = vld [vmem:[#allocation2 + $0x8] sm:$0xff]
          %v642 = vld [vmem:[#allocation2 + $0x10] sm:$0xff]
          %v643 = vld [vmem:[#allocation2 + $0x18] sm:$0xff]
          %v644 = vld [vmem:[#allocation2 + $0x20] sm:$0xff]
          %v645 = vld [vmem:[#allocation2 + $0x28] sm:$0xff]
          %v646 = vld [vmem:[#allocation2 + $0x30] sm:$0xff]
          %v647 = vld [vmem:[#allocation2 + $0x38] sm:$0xff]
          %v648 = vld [vmem:[#allocation2 + $0x40] sm:$0xff]
          %v649 = vld [vmem:[#allocation2 + $0x48] sm:$0xff]
          %v650 = vld [vmem:[#allocation2 + $0x50] sm:$0xff]
          %v651 = vld [vmem:[#allocation2 + $0x58] sm:$0xff]
          %v652 = vld [vmem:[#allocation2 + $0x60] sm:$0xff]
          %v653 = vld [vmem:[#allocation2 + $0x68] sm:$0xff]
          %v654 = vld [vmem:[#allocation2 + $0x70] sm:$0xff]
          %v655 = vld [vmem:[#allocation2 + $0x78] sm:$0xff]
          %v656 = vpack.c.bf16 %v641, %v640
          %v657 = vpack.c.bf16 %v643, %v642
          %v658 = vpack.c.bf16 %v645, %v644
          %v659 = vpack.c.bf16 %v647, %v646
          %v660 = vpack.c.bf16 %v649, %v648
          %v661 = vpack.c.bf16 %v651, %v650
          %v662 = vpack.c.bf16 %v653, %v652
          %v663 = vpack.c.bf16 %v655, %v654
          %v664 = vld [vmem:[%s2] sm:$0xf]
          %v665 = vld [vmem:[%s2 + $0x4] sm:$0xf]
          %v666 = vld [vmem:[%s3] sm:$0x1]
          %v668 = vlaneseq
          %v669 = vshrl.u32 %v668, 7
          %v670 = vsub.s32 0, %v669
          %v671 = vrot.slane %v666, %v670
          %v675 = vunpack.c.l.b16 %v664
          %v676 = vunpack.c.l.b16 %v665
          %v677 = vpack.c.b16 %v676, %v675
          %v680 = vsel %vm619, %v656, 0
          %v683 = vsel %vm619, %v657, 0
          %v686 = vsel %vm619, %v658, 0
          %v689 = vsel %vm619, %v659, 0
          %v692 = vsel %vm619, %v660, 0
          %v695 = vsel %vm619, %v661, 0
          %v698 = vsel %vm619, %v662, 0
          %v701 = vsel %vm619, %v663, 0
          %703 = vmatprep.subr.bf16.mxu0 0
          %704 = vmatpush1.bf16.msra.mxu0 %v677
          %705 = vmatprep.subr.bf16.mxu0 0
          %706 = vmatpush1.bf16.msra.mxu0 0
          %707 = vmatprep.subr.bf16.mxu0 0
          %708 = vmatpush1.bf16.msra.mxu0 0
          %709 = vmatprep.subr.bf16.mxu0 0
          %710 = vmatpush1.bf16.msra.mxu0 0
          %711 = vmatprep.subr.bf16.mxu0 0
          %712 = vmatpush1.bf16.msra.mxu0 0
          %713 = vmatprep.subr.bf16.mxu0 0
          %714 = vmatpush1.bf16.msra.mxu0 0
          %715 = vmatprep.subr.bf16.mxu0 0
          %716 = vmatpush1.bf16.msra.mxu0 0
          %717 = vmatprep.subr.bf16.mxu0 0
          %718 = vmatpush1.bf16.msra.mxu0 0
          %719 = vmatprep.subr.bf16.mxu0 0
          %720 = vmatpush1.bf16.msra.mxu0 0
          %721 = vmatprep.subr.bf16.mxu0 0
          %722 = vmatpush1.bf16.msra.mxu0 0
          %723 = vmatprep.subr.bf16.mxu0 0
          %724 = vmatpush1.bf16.msra.mxu0 0
          %725 = vmatprep.subr.bf16.mxu0 0
          %726 = vmatpush1.bf16.msra.mxu0 0
          %727 = vmatprep.subr.bf16.mxu0 0
          %728 = vmatpush1.bf16.msra.mxu0 0
          %729 = vmatprep.subr.bf16.mxu0 0
          %730 = vmatpush1.bf16.msra.mxu0 0
          %731 = vmatprep.subr.bf16.mxu0 0
          %732 = vmatpush1.bf16.msra.mxu0 0
          %733 = vmatprep.subr.bf16.mxu0 0
          %734 = vmatpush1.bf16.msra.mxu0 0
          %735 = vmatprep.mubr.bf16.mxu0 0
          %736 = vmatmul.mubr.bf16.gmra.mrb[0].mxu0 %v680
          %v737 = vpop.f32.mrb[0].mxu0
          %v738 = vadd.f32 %v671, %v737
          %v739 = vpop.f32.mrb[0].mxu0
          %v740 = vpop.f32.mrb[0].mxu0
          %v741 = vadd.f32 %v671, %v740
          %v742 = vpop.f32.mrb[0].mxu0
          %743 = vmatprep.mubr.bf16.mxu0 0
          %744 = vmatmul.mubr.bf16.gmra.mrb[0].mxu0 %v683
          %v745 = vpop.f32.mrb[0].mxu0
          %v746 = vadd.f32 %v671, %v745
          %v747 = vpop.f32.mrb[0].mxu0
          %v748 = vpop.f32.mrb[0].mxu0
          %v749 = vadd.f32 %v671, %v748
          %v750 = vpop.f32.mrb[0].mxu0
          %751 = vmatprep.mubr.bf16.mxu0 0
          %752 = vmatmul.mubr.bf16.gmra.mrb[0].mxu0 %v686
          %v753 = vpop.f32.mrb[0].mxu0
          %v754 = vadd.f32 %v671, %v753
          %v755 = vpop.f32.mrb[0].mxu0
          %v756 = vpop.f32.mrb[0].mxu0
          %v757 = vadd.f32 %v671, %v756
          %v758 = vpop.f32.mrb[0].mxu0
          %759 = vmatprep.mubr.bf16.mxu0 0
          %760 = vmatmul.mubr.bf16.gmra.mrb[0].mxu0 %v689
          %v761 = vpop.f32.mrb[0].mxu0
          %v762 = vadd.f32 %v671, %v761
          %v763 = vpop.f32.mrb[0].mxu0
          %v764 = vpop.f32.mrb[0].mxu0
          %v765 = vadd.f32 %v671, %v764
          %v766 = vpop.f32.mrb[0].mxu0
          %767 = vmatprep.mubr.bf16.mxu0 0
          %768 = vmatmul.mubr.bf16.gmra.mrb[0].mxu0 %v692
          %v769 = vpop.f32.mrb[0].mxu0
          %v770 = vadd.f32 %v671, %v769
          %v771 = vpop.f32.mrb[0].mxu0
          %v772 = vpop.f32.mrb[0].mxu0
          %v773 = vadd.f32 %v671, %v772
          %v774 = vpop.f32.mrb[0].mxu0
          %775 = vmatprep.mubr.bf16.mxu0 0
          %776 = vmatmul.mubr.bf16.gmra.mrb[0].mxu0 %v695
          %v777 = vpop.f32.mrb[0].mxu0
          %v778 = vadd.f32 %v671, %v777
          %v779 = vpop.f32.mrb[0].mxu0
          %v780 = vpop.f32.mrb[0].mxu0
          %v781 = vadd.f32 %v671, %v780
          %v782 = vpop.f32.mrb[0].mxu0
          %783 = vmatprep.mubr.bf16.mxu0 0
          %784 = vmatmul.mubr.bf16.gmra.mrb[0].mxu0 %v698
          %v785 = vpop.f32.mrb[0].mxu0
          %v786 = vadd.f32 %v671, %v785
          %v787 = vpop.f32.mrb[0].mxu0
          %v788 = vpop.f32.mrb[0].mxu0
          %v789 = vadd.f32 %v671, %v788
          %v790 = vpop.f32.mrb[0].mxu0
          %791 = vmatprep.mubr.bf16.mxu0 0
          %792 = vmatmul.mubr.bf16.gmra.mrb[0].mxu0 %v701
          %v793 = vpop.f32.mrb[0].mxu0
          %v794 = vadd.f32 %v671, %v793
          %v795 = vpop.f32.mrb[0].mxu0
          %v796 = vpop.f32.mrb[0].mxu0
          %v797 = vadd.f32 %v671, %v796
          %v798 = vpop.f32.mrb[0].mxu0
          %799 = vdwg.mxu0
          %v800 = vmax.f32 %v738, 0.0
          %v801 = vmax.f32 %v741, 0.0
          %v802 = vmax.f32 %v746, 0.0
          %v803 = vmax.f32 %v749, 0.0
          %v804 = vmax.f32 %v754, 0.0
          %v805 = vmax.f32 %v757, 0.0
          %v806 = vmax.f32 %v762, 0.0
          %v807 = vmax.f32 %v765, 0.0
          %v808 = vmax.f32 %v770, 0.0
          %v809 = vmax.f32 %v773, 0.0
          %v810 = vmax.f32 %v778, 0.0
          %v811 = vmax.f32 %v781, 0.0
          %v812 = vmax.f32 %v786, 0.0
          %v813 = vmax.f32 %v789, 0.0
          %v814 = vmax.f32 %v794, 0.0
          %v815 = vmax.f32 %v797, 0.0
          %v816 = vpack.c.bf16 %v801, %v800
          %v817 = vpack.c.bf16 %v803, %v802
          %v818 = vpack.c.bf16 %v805, %v804
          %v819 = vpack.c.bf16 %v807, %v806
          %v820 = vpack.c.bf16 %v809, %v808
          %v821 = vpack.c.bf16 %v811, %v810
          %v822 = vpack.c.bf16 %v813, %v812
          %v823 = vpack.c.bf16 %v815, %v814
          %v832 = vunpack.c.l.b16 %v816
          %v833 = vunpack.c.h.b16 %v816
          %v834 = vunpack.c.l.b16 %v817
          %v835 = vunpack.c.h.b16 %v817
          %v836 = vunpack.c.l.b16 %v818
          %v837 = vunpack.c.h.b16 %v818
          %v838 = vunpack.c.l.b16 %v819
          %v839 = vunpack.c.h.b16 %v819
          %v840 = vunpack.c.l.b16 %v820
          %v841 = vunpack.c.h.b16 %v820
          %v842 = vunpack.c.l.b16 %v821
          %v843 = vunpack.c.h.b16 %v821
          %v844 = vunpack.c.l.b16 %v822
          %v845 = vunpack.c.h.b16 %v822
          %v846 = vunpack.c.l.b16 %v823
          %v847 = vunpack.c.h.b16 %v823
          %v848 = vpack.c.b16 %v832, %v832
          %v849 = vpack.c.b16 %v833, %v833
          %v850 = vpack.c.b16 %v834, %v834
          %v851 = vpack.c.b16 %v835, %v835
          %v852 = vpack.c.b16 %v836, %v836
          %v853 = vpack.c.b16 %v837, %v837
          %v854 = vpack.c.b16 %v838, %v838
          %v855 = vpack.c.b16 %v839, %v839
          %v856 = vpack.c.b16 %v840, %v840
          %v857 = vpack.c.b16 %v841, %v841
          %v858 = vpack.c.b16 %v842, %v842
          %v859 = vpack.c.b16 %v843, %v843
          %v860 = vpack.c.b16 %v844, %v844
          %v861 = vpack.c.b16 %v845, %v845
          %v862 = vpack.c.b16 %v846, %v846
          %v863 = vpack.c.b16 %v847, %v847
          %880 = vst [vmem:[%s338] sm:$0xf] %v848
          %881 = vst [vmem:[%s338 + $0x4] sm:$0xf] %v849
          %882 = vst [vmem:[%s338 + $0x8] sm:$0xf] %v850
          %883 = vst [vmem:[%s338 + $0xc] sm:$0xf] %v851
          %884 = vst [vmem:[%s338 + $0x10] sm:$0xf] %v852
          %885 = vst [vmem:[%s338 + $0x14] sm:$0xf] %v853
          %886 = vst [vmem:[%s338 + $0x18] sm:$0xf] %v854
          %887 = vst [vmem:[%s338 + $0x1c] sm:$0xf] %v855
          %888 = vst [vmem:[%s338 + $0x20] sm:$0xf] %v856
          %889 = vst [vmem:[%s338 + $0x24] sm:$0xf] %v857
          %890 = vst [vmem:[%s338 + $0x28] sm:$0xf] %v858
          %891 = vst [vmem:[%s338 + $0x2c] sm:$0xf] %v859
          %892 = vst [vmem:[%s338 + $0x30] sm:$0xf] %v860
          %893 = vst [vmem:[%s338 + $0x34] sm:$0xf] %v861
          %894 = vst [vmem:[%s338 + $0x38] sm:$0xf] %v862
          %895 = vst [vmem:[%s338 + $0x3c] sm:$0xf] %v863
        $region85: #{gnn_forward.2} parent=72 // pred_fallthru
          _
        %s896 = smul.u32 16, %s19
        %p897 = scmp.lt.s32.totalorder %s896, 31
        %s898 = scalar_select %p897, %s896, 31
        %s899 = smul.addr %s898, 4
        %s900 = scalar_lea.vmem %s4, %s899
        // Predicated region
        $region86: #{gnn_forward.2} parent=72 // pred_check
          %p901 = pneg %p141
        $region87: #{gnn_forward.2} parent=72 // pred_check_branch
          %903 = sbr.rel (%p901) target = $region89
        $region88: #{gnn_forward.2} parent=72 // pred_region
          %s904 = smul.u32 16, %s19
        $region89: #{gnn_forward.2} parent=72 // pred_fallthru
          _
      $region73: #{gnn_forward.2} parent=5 // pred_fallthru
        _
      %p905 = scmp.le.s32.totalorder 2, %s10
      // Predicated region
      $region90: #{gnn_forward.2} parent=5 // pred_check
        %p906 = pneg %p905
      $region91: #{gnn_forward.2} parent=5 // pred_check_branch
        %908 = sbr.rel (%p906) target = $region93
      $region92: #{gnn_forward.2} parent=5 // pred_region
        %s909 = ssub.s32 %s10, 2
        // Predicated region
        $region94: #{gnn_forward.2} parent=92 // pred_check
          %p910 = pneg %p147
        $region95: #{gnn_forward.2} parent=92 // pred_check_branch
          %912 = sbr.rel (%p910) target = $region97
        $region96: #{gnn_forward.2} parent=92 // pred_region
          %s913 = smul.u32 16, %s21
          %p914 = scmp.lt.s32.totalorder %s913, 31
          %s915 = scalar_select %p914, %s913, 31
          %s916 = smul.addr %s915, 4
          %s917 = scalar_lea.vmem %s4, %s916
        $region97: #{gnn_forward.2} parent=92 // pred_fallthru
          _
      $region93: #{gnn_forward.2} parent=5 // pred_fallthru
        _
    $region6: #{gnn_forward.2} parent=1 // loop_footer
      %s14 = sadd.s32 1, %s10
    $region7: #{gnn_forward.2} parent=1 // loop_footer_branch
      %9 = sbr.rel target = $region3
    $region8: #{gnn_forward.2} parent=1 // loop_exit
      _

</llo_original>
